<compile_context>
chip_gen: v7x
topology: tpu7x:2x2x1
jax: 0.10.0
libtpu: 0.0.40
codegen_flags: <defaults>
</compile_context>

<pallas_src>
import jax
import jax.numpy as jnp
from jax import lax
from jax.experimental import pallas as pl
from jax.experimental.pallas import tpu as pltpu


_TAP_OFFSETS = [(dy, dx) for dy in (-1, 0, 1) for dx in (-1, 0, 1)]
_CENTER = 4  # (dy, dx) == (0, 0)


def _make_kernel(H, W, G, Cin, Chid, Cout, stride, has_expand, use_shortcut):
    HW = H * W

    def kernel(*refs):
        it = iter(refs)
        x_ref = next(it)
        if has_expand:
            w1_ref, b1_ref = next(it), next(it)
        wm_ref, b2_ref = next(it), next(it)
        if stride != 1:
            sel_ref = next(it)
        w3_ref, b3_ref = next(it), next(it)
        o_ref = next(it)
        acc_vmem = next(it)                       # (Chid, G*HW) bf16 scratch

        # --- per-image chunk: 1x1 expand (+BN, ReLU6) and 3x3 depthwise ------
        for g in range(G):
            lo = g * HW
            xg = x_ref[0, :, lo:lo + HW]          # (Cin, HW) f32

            if has_expand:
                h = jnp.dot(w1_ref[...], xg.astype(jnp.bfloat16),
                            preferred_element_type=jnp.float32)   # (Chid, HW)
                h = jnp.clip(h + b1_ref[...], 0.0, 6.0)
            else:
                h = xg

            # Depthwise 3x3, pad=1, stride-1: weights already carry the border
            # masks.  Center tap initializes the accumulator (no roll, mask=1).
            acc = wm_ref[_CENTER] * h
            for k, (dy, dx) in enumerate(_TAP_OFFSETS):
                if k == _CENTER:
                    continue
                off = dy * W + dx
                # roll matches jnp.roll: rolled[p] = h[p + off]; border taps
                # that wrap are zeroed by the folded masks.
                shifted = pltpu.roll(h, shift=(-off) % HW, axis=1)
                acc = acc + wm_ref[k] * shifted
            acc = jnp.clip(acc + b2_ref[...], 0.0, 6.0)
            acc_vmem[:, lo:lo + HW] = acc.astype(jnp.bfloat16)

        # --- 1x1 project (+folded BN, linear) at full stride-1 resolution ----
        tmp = jnp.dot(w3_ref[...], acc_vmem[...],
                      preferred_element_type=jnp.float32)         # (Cout, G*HW)

        # --- stride-2: subsample AFTER projection (0/1 selection matmul) -----
        if stride != 1:
            out = jnp.dot(tmp.astype(jnp.bfloat16), sel_ref[...],
                          preferred_element_type=jnp.float32)     # (Cout, G*HWout)
        else:
            out = tmp

        out = out + b3_ref[...]
        if use_shortcut:
            out = out + x_ref[0]

        o_ref[0] = out.astype(o_ref.dtype)

    return kernel


def _fold_bn(gamma, beta, mean, var, eps=1e-5):
    s = gamma / jnp.sqrt(var + eps)
    b = beta - mean * s
    return s, b


def inverted_residual_pallas(x_nchw, params, *, stride, expand_ratio,
                             lane_budget=512):
    N, Cin, H, W = x_nchw.shape
    has_expand = expand_ratio != 1
    Chid = Cin * expand_ratio
    Cout = params["w3"].shape[0]
    use_shortcut = (stride == 1) and (Cin == Cout)
    HW = H * W
    Hout = (H - 1) // stride + 1        # conv: k=3, pad=1
    Wout = (W - 1) // stride + 1
    HWout = Hout * Wout

    # Fold G images per grid step onto the lane axis.  (On v7x with N >= 4
    # this still leaves >= 2 "parallel" grid steps for the two TensorCores.)
    G = min(N, max(1, lane_budget // HW))
    while N % G:
        G -= 1
    LPS, LPSout = G * HW, G * HWout
    steps = N // G

    # NCHW -> (steps, Cin, G*HW): channels on sublanes, image-major flattened
    # spatial on lanes.
    x = (x_nchw.reshape(steps, G, Cin, HW).transpose(0, 2, 1, 3)
         .reshape(steps, Cin, LPS).astype(jnp.float32))

    args = [x]
    in_specs = [pl.BlockSpec((1, Cin, LPS), lambda n: (n, 0, 0))]

    if has_expand:
        s1, b1 = _fold_bn(params["bn1_g"], params["bn1_b"],
                          params["bn1_m"], params["bn1_v"])
        w1f = (params["w1"][:, :, 0, 0] * s1[:, None]).astype(jnp.bfloat16)
        args += [w1f, b1.reshape(Chid, 1).astype(jnp.float32)]
        in_specs += [pl.BlockSpec((Chid, Cin), lambda n: (0, 0)),
                     pl.BlockSpec((Chid, 1), lambda n: (0, 0))]

    s2, b2 = _fold_bn(params["bn2_g"], params["bn2_b"],
                      params["bn2_m"], params["bn2_v"])
    dwf = params["w_dw"][:, 0].reshape(Chid, 9) * s2[:, None]     # (Chid, 9)

    # Per-tap border-validity masks over the flattened HW lane axis, folded
    # into the depthwise weights on the host: wm[k] = dw[:, k] (outer) mask[k].
    yy, xx = jnp.meshgrid(jnp.arange(H), jnp.arange(W), indexing="ij")
    masks = []
    for ky in range(3):
        for kx in range(3):
            m = ((yy + ky - 1 >= 0) & (yy + ky - 1 < H) &
                 (xx + kx - 1 >= 0) & (xx + kx - 1 < W))
            masks.append(m.reshape(HW))
    mask9 = jnp.stack(masks, 0).astype(jnp.float32)               # (9, HW)
    wm = (dwf.T[:, :, None] * mask9[:, None, :]).astype(jnp.float32)  # (9,Chid,HW)

    args += [wm, b2.reshape(Chid, 1).astype(jnp.float32)]
    in_specs += [pl.BlockSpec((9, Chid, HW), lambda n: (0, 0, 0)),
                 pl.BlockSpec((Chid, 1), lambda n: (0, 0))]

    if stride != 1:
        # Block-diagonal 0/1 selection: column q picks, inside image
        # g = q // HWout, the flattened stride-1 position
        # (stride*(q'//Wout), stride*(q'%Wout)).
        q = jnp.arange(LPSout)
        gg = q // HWout
        qp = q % HWout
        rows = gg * HW + stride * (qp // Wout) * W + stride * (qp % Wout)
        sel = jnp.zeros((LPS, LPSout), jnp.float32).at[rows, q].set(1.0)
        args += [sel.astype(jnp.bfloat16)]
        in_specs += [pl.BlockSpec((LPS, LPSout), lambda n: (0, 0))]

    s3, b3 = _fold_bn(params["bn3_g"], params["bn3_b"],
                      params["bn3_m"], params["bn3_v"])
    w3f = (params["w3"][:, :, 0, 0] * s3[:, None]).astype(jnp.bfloat16)
    args += [w3f, b3.reshape(Cout, 1).astype(jnp.float32)]
    in_specs += [pl.BlockSpec((Cout, Chid), lambda n: (0, 0)),
                 pl.BlockSpec((Cout, 1), lambda n: (0, 0))]

    kernel = _make_kernel(H, W, G, Cin, Chid, Cout, stride,
                          has_expand, use_shortcut)

    out = pl.pallas_call(
        kernel,
        out_shape=jax.ShapeDtypeStruct((steps, Cout, LPSout), jnp.float32),
        grid_spec=pltpu.PrefetchScalarGridSpec(
            num_scalar_prefetch=0,
            grid=(steps,),
            in_specs=in_specs,
            out_specs=pl.BlockSpec((1, Cout, LPSout), lambda n: (n, 0, 0)),
            scratch_shapes=[pltpu.VMEM((Chid, LPS), jnp.bfloat16)],
        ),
        compiler_params=pltpu.CompilerParams(
            dimension_semantics=("parallel",)),
    )(*args)

    # (steps, Cout, G*HWout) -> NCHW
    return (out.reshape(steps, Cout, G, HWout).transpose(0, 2, 1, 3)
            .reshape(N, Cout, Hout, Wout))


def ref_inverted_residual(x, params, *, stride, expand_ratio, eps=1e-5):
    """Pure-JAX (NCHW) reference mirroring the PyTorch forward (BN in eval)."""
    def bn(y, g, b, m, v):
        sh = (1, -1, 1, 1)
        return (y - m.reshape(sh)) / jnp.sqrt(v.reshape(sh) + eps) * \
            g.reshape(sh) + b.reshape(sh)

    dn = ("NCHW", "OIHW", "NCHW")
    Cin = x.shape[1]
    Cout = params["w3"].shape[0]
    y = x
    if expand_ratio != 1:
        y = lax.conv_general_dilated(y, params["w1"], (1, 1), [(0, 0), (0, 0)],
                                     dimension_numbers=dn,
                                     precision=lax.Precision.HIGHEST)
        y = jnp.clip(bn(y, params["bn1_g"], params["bn1_b"],
                        params["bn1_m"], params["bn1_v"]), 0.0, 6.0)
    Chid = y.shape[1]
    y = lax.conv_general_dilated(y, params["w_dw"], (stride, stride),
                                 [(1, 1), (1, 1)], dimension_numbers=dn,
                                 feature_group_count=Chid,
                                 precision=lax.Precision.HIGHEST)
    y = jnp.clip(bn(y, params["bn2_g"], params["bn2_b"],
                    params["bn2_m"], params["bn2_v"]), 0.0, 6.0)
    y = lax.conv_general_dilated(y, params["w3"], (1, 1), [(0, 0), (0, 0)],
                                 dimension_numbers=dn,
                                 precision=lax.Precision.HIGHEST)
    y = bn(y, params["bn3_g"], params["bn3_b"],
           params["bn3_m"], params["bn3_v"])
    if stride == 1 and Cin == Cout:
        y = y + x
    return y


def make_params(key, Cin, Cout, expand_ratio):
    Chid = Cin * expand_ratio
    ks = jax.random.split(key, 16)
    f32 = jnp.float32

    def bn_params(k0, k1, k2, k3, c):
        return dict(
            g=1.0 + 0.1 * jax.random.normal(k0, (c,), f32),
            b=0.1 * jax.random.normal(k1, (c,), f32),
            m=0.1 * jax.random.normal(k2, (c,), f32),
            v=0.5 + jnp.abs(jax.random.normal(k3, (c,), f32)) * 0.5,
        )

    bn1 = bn_params(ks[1], ks[2], ks[3], ks[4], Chid)
    bn2 = bn_params(ks[6], ks[7], ks[8], ks[9], Chid)
    bn3 = bn_params(ks[11], ks[12], ks[13], ks[14], Cout)
    return dict(
        w1=0.2 * jax.random.normal(ks[0], (Chid, Cin, 1, 1), f32),
        bn1_g=bn1["g"], bn1_b=bn1["b"], bn1_m=bn1["m"], bn1_v=bn1["v"],
        w_dw=0.2 * jax.random.normal(ks[5], (Chid, 1, 3, 3), f32),
        bn2_g=bn2["g"], bn2_b=bn2["b"], bn2_m=bn2["m"], bn2_v=bn2["v"],
        w3=0.2 * jax.random.normal(ks[10], (Cout, Chid, 1, 1), f32),
        bn3_g=bn3["g"], bn3_b=bn3["b"], bn3_m=bn3["m"], bn3_v=bn3["v"],
    )


if __name__ == "__main__":
    key = jax.random.PRNGKey(0)
    kp1, kp2, kx = jax.random.split(key, 3)

    N, Cin, H, W = 2, 8, 16, 16
    x = jax.random.normal(kx, (N, Cin, H, W), jnp.float32)

    # Block A: InvertedResidual(8, 8, stride=1, expand_ratio=6) — shortcut path.
    params1 = make_params(kp1, Cin, 8, 6)
    out1 = jax.block_until_ready(
        inverted_residual_pallas(x, params1, stride=1, expand_ratio=6))
    ref1 = jax.block_until_ready(
        ref_inverted_residual(x, params1, stride=1, expand_ratio=6))
    assert out1.shape == ref1.shape, (out1.shape, ref1.shape)
    assert jnp.allclose(out1, ref1, atol=2e-2, rtol=2e-2), \
        float(jnp.max(jnp.abs(out1 - ref1)))

    # Block B: InvertedResidual(8, 16, stride=2, expand_ratio=6) — downsample path.
    params2 = make_params(kp2, Cin, 16, 6)
    out2 = jax.block_until_ready(
        inverted_residual_pallas(x, params2, stride=2, expand_ratio=6))
    ref2 = jax.block_until_ready(
        ref_inverted_residual(x, params2, stride=2, expand_ratio=6))
    assert out2.shape == ref2.shape, (out2.shape, ref2.shape)
    assert jnp.allclose(out2, ref2, atol=2e-2, rtol=2e-2), \
        float(jnp.max(jnp.abs(out2 - ref2)))

    print("KERNEL_OK")
</pallas_src>

<mosaic_0001>
module attributes {stable_mosaic.version = 11 : i64} {
  func.func @kernel(%arg0: i32, %arg1: memref<1x8x512xf32, #tpu.memory_space<vmem>>, %arg2: memref<48x8xbf16, #tpu.memory_space<vmem>>, %arg3: memref<48x1xf32, #tpu.memory_space<vmem>>, %arg4: memref<9x48x256xf32, #tpu.memory_space<vmem>>, %arg5: memref<48x1xf32, #tpu.memory_space<vmem>>, %arg6: memref<8x48xbf16, #tpu.memory_space<vmem>>, %arg7: memref<8x1xf32, #tpu.memory_space<vmem>>, %arg8: memref<1x8x512xf32, #tpu.memory_space<vmem>>, %arg9: memref<48x512xbf16, #tpu.memory_space<vmem>>) attributes {dimension_semantics = [#tpu.dimension_semantics<parallel>], iteration_bounds = array<i64: 1>, scalar_prefetch = 0 : i64, scratch_operands = 1 : i64, tpu.core_type = #tpu.core_type<tc>, window_params = [{transform_indices = @transform_0, window_bounds = array<i64: 1, 8, 512>}, {pipeline_mode = #tpu.pipeline_mode<synchronous>, transform_indices = @transform_1, window_bounds = array<i64: 48, 8>}, {pipeline_mode = #tpu.pipeline_mode<synchronous>, transform_indices = @transform_2, window_bounds = array<i64: 48, 1>}, {pipeline_mode = #tpu.pipeline_mode<synchronous>, transform_indices = @transform_3, window_bounds = array<i64: 9, 48, 256>}, {pipeline_mode = #tpu.pipeline_mode<synchronous>, transform_indices = @transform_4, window_bounds = array<i64: 48, 1>}, {pipeline_mode = #tpu.pipeline_mode<synchronous>, transform_indices = @transform_5, window_bounds = array<i64: 8, 48>}, {pipeline_mode = #tpu.pipeline_mode<synchronous>, transform_indices = @transform_6, window_bounds = array<i64: 8, 1>}, {transform_indices = @transform_7, window_bounds = array<i64: 1, 8, 512>}]} {
    %c0 = arith.constant 0 : index
    %c0_0 = arith.constant 0 : index
    %c0_1 = arith.constant 0 : index
    %0 = vector.load %arg1[%c0, %c0_0, %c0_1] : memref<1x8x512xf32, #tpu.memory_space<vmem>>, vector<1x8x256xf32>
    %1 = vector.shape_cast %0 : vector<1x8x256xf32> to vector<8x256xf32>
    %c0_2 = arith.constant 0 : index
    %c0_3 = arith.constant 0 : index
    %2 = vector.load %arg2[%c0_2, %c0_3] : memref<48x8xbf16, #tpu.memory_space<vmem>>, vector<48x8xbf16>
    %3 = arith.truncf %1 : vector<8x256xf32> to vector<8x256xbf16>
    %cst = arith.constant dense<0.000000e+00> : vector<48x256xf32>
    %4 = tpu.matmul %2, %3, %cst {dimension_numbers = #tpu.dot_dimension_numbers<[1], [0], [0], [1], [0, 0, 1, 1], [], []>} : vector<48x8xbf16>, vector<8x256xbf16>, vector<48x256xf32> -> vector<48x256xf32>
    %c0_4 = arith.constant 0 : index
    %c0_5 = arith.constant 0 : index
    %5 = vector.load %arg3[%c0_4, %c0_5] : memref<48x1xf32, #tpu.memory_space<vmem>>, vector<48x1xf32>
    %6 = vector.broadcast %5 : vector<48x1xf32> to vector<48x256xf32>
    %7 = arith.addf %4, %6 : vector<48x256xf32>
    %cst_6 = arith.constant 0.000000e+00 : f32
    %cst_7 = arith.constant 6.000000e+00 : f32
    %8 = vector.broadcast %cst_6 : f32 to vector<48x256xf32>
    %9 = arith.maximumf %8, %7 : vector<48x256xf32>
    %10 = vector.broadcast %cst_7 : f32 to vector<48x256xf32>
    %11 = arith.minimumf %10, %9 : vector<48x256xf32>
    %c4 = arith.constant 4 : index
    %c0_8 = arith.constant 0 : index
    %c0_9 = arith.constant 0 : index
    %12 = vector.load %arg4[%c4, %c0_8, %c0_9] : memref<9x48x256xf32, #tpu.memory_space<vmem>>, vector<1x48x256xf32>
    %13 = vector.shape_cast %12 : vector<1x48x256xf32> to vector<48x256xf32>
    %14 = arith.mulf %13, %11 : vector<48x256xf32>
    %c17_i32 = arith.constant 17 : i32
    %15 = tpu.dynamic_rotate %11 by %c17_i32 dim 1 : vector<48x256xf32>, i32 -> vector<48x256xf32>
    %c0_10 = arith.constant 0 : index
    %c0_11 = arith.constant 0 : index
    %c0_12 = arith.constant 0 : index
    %16 = vector.load %arg4[%c0_10, %c0_11, %c0_12] : memref<9x48x256xf32, #tpu.memory_space<vmem>>, vector<1x48x256xf32>
    %17 = vector.shape_cast %16 : vector<1x48x256xf32> to vector<48x256xf32>
    %18 = arith.mulf %17, %15 : vector<48x256xf32>
    %19 = arith.addf %14, %18 : vector<48x256xf32>
    %c16_i32 = arith.constant 16 : i32
    %20 = tpu.dynamic_rotate %11 by %c16_i32 dim 1 : vector<48x256xf32>, i32 -> vector<48x256xf32>
    %c1 = arith.constant 1 : index
    %c0_13 = arith.constant 0 : index
    %c0_14 = arith.constant 0 : index
    %21 = vector.load %arg4[%c1, %c0_13, %c0_14] : memref<9x48x256xf32, #tpu.memory_space<vmem>>, vector<1x48x256xf32>
    %22 = vector.shape_cast %21 : vector<1x48x256xf32> to vector<48x256xf32>
    %23 = arith.mulf %22, %20 : vector<48x256xf32>
    %24 = arith.addf %19, %23 : vector<48x256xf32>
    %c15_i32 = arith.constant 15 : i32
    %25 = tpu.dynamic_rotate %11 by %c15_i32 dim 1 : vector<48x256xf32>, i32 -> vector<48x256xf32>
    %c2 = arith.constant 2 : index
    %c0_15 = arith.constant 0 : index
    %c0_16 = arith.constant 0 : index
    %26 = vector.load %arg4[%c2, %c0_15, %c0_16] : memref<9x48x256xf32, #tpu.memory_space<vmem>>, vector<1x48x256xf32>
    %27 = vector.shape_cast %26 : vector<1x48x256xf32> to vector<48x256xf32>
    %28 = arith.mulf %27, %25 : vector<48x256xf32>
    %29 = arith.addf %24, %28 : vector<48x256xf32>
    %c1_i32 = arith.constant 1 : i32
    %30 = tpu.dynamic_rotate %11 by %c1_i32 dim 1 : vector<48x256xf32>, i32 -> vector<48x256xf32>
    %c3 = arith.constant 3 : index
    %c0_17 = arith.constant 0 : index
    %c0_18 = arith.constant 0 : index
    %31 = vector.load %arg4[%c3, %c0_17, %c0_18] : memref<9x48x256xf32, #tpu.memory_space<vmem>>, vector<1x48x256xf32>
    %32 = vector.shape_cast %31 : vector<1x48x256xf32> to vector<48x256xf32>
    %33 = arith.mulf %32, %30 : vector<48x256xf32>
    %34 = arith.addf %29, %33 : vector<48x256xf32>
    %c255_i32 = arith.constant 255 : i32
    %35 = tpu.dynamic_rotate %11 by %c255_i32 dim 1 : vector<48x256xf32>, i32 -> vector<48x256xf32>
    %c5 = arith.constant 5 : index
    %c0_19 = arith.constant 0 : index
    %c0_20 = arith.constant 0 : index
    %36 = vector.load %arg4[%c5, %c0_19, %c0_20] : memref<9x48x256xf32, #tpu.memory_space<vmem>>, vector<1x48x256xf32>
    %37 = vector.shape_cast %36 : vector<1x48x256xf32> to vector<48x256xf32>
    %38 = arith.mulf %37, %35 : vector<48x256xf32>
    %39 = arith.addf %34, %38 : vector<48x256xf32>
    %c241_i32 = arith.constant 241 : i32
    %40 = tpu.dynamic_rotate %11 by %c241_i32 dim 1 : vector<48x256xf32>, i32 -> vector<48x256xf32>
    %c6 = arith.constant 6 : index
    %c0_21 = arith.constant 0 : index
    %c0_22 = arith.constant 0 : index
    %41 = vector.load %arg4[%c6, %c0_21, %c0_22] : memref<9x48x256xf32, #tpu.memory_space<vmem>>, vector<1x48x256xf32>
    %42 = vector.shape_cast %41 : vector<1x48x256xf32> to vector<48x256xf32>
    %43 = arith.mulf %42, %40 : vector<48x256xf32>
    %44 = arith.addf %39, %43 : vector<48x256xf32>
    %c240_i32 = arith.constant 240 : i32
    %45 = tpu.dynamic_rotate %11 by %c240_i32 dim 1 : vector<48x256xf32>, i32 -> vector<48x256xf32>
    %c7 = arith.constant 7 : index
    %c0_23 = arith.constant 0 : index
    %c0_24 = arith.constant 0 : index
    %46 = vector.load %arg4[%c7, %c0_23, %c0_24] : memref<9x48x256xf32, #tpu.memory_space<vmem>>, vector<1x48x256xf32>
    %47 = vector.shape_cast %46 : vector<1x48x256xf32> to vector<48x256xf32>
    %48 = arith.mulf %47, %45 : vector<48x256xf32>
    %49 = arith.addf %44, %48 : vector<48x256xf32>
    %c239_i32 = arith.constant 239 : i32
    %50 = tpu.dynamic_rotate %11 by %c239_i32 dim 1 : vector<48x256xf32>, i32 -> vector<48x256xf32>
    %c8 = arith.constant 8 : index
    %c0_25 = arith.constant 0 : index
    %c0_26 = arith.constant 0 : index
    %51 = vector.load %arg4[%c8, %c0_25, %c0_26] : memref<9x48x256xf32, #tpu.memory_space<vmem>>, vector<1x48x256xf32>
    %52 = vector.shape_cast %51 : vector<1x48x256xf32> to vector<48x256xf32>
    %53 = arith.mulf %52, %50 : vector<48x256xf32>
    %54 = arith.addf %49, %53 : vector<48x256xf32>
    %c0_27 = arith.constant 0 : index
    %c0_28 = arith.constant 0 : index
    %55 = vector.load %arg5[%c0_27, %c0_28] : memref<48x1xf32, #tpu.memory_space<vmem>>, vector<48x1xf32>
    %56 = vector.broadcast %55 : vector<48x1xf32> to vector<48x256xf32>
    %57 = arith.addf %54, %56 : vector<48x256xf32>
    %cst_29 = arith.constant 0.000000e+00 : f32
    %cst_30 = arith.constant 6.000000e+00 : f32
    %58 = vector.broadcast %cst_29 : f32 to vector<48x256xf32>
    %59 = arith.maximumf %58, %57 : vector<48x256xf32>
    %60 = vector.broadcast %cst_30 : f32 to vector<48x256xf32>
    %61 = arith.minimumf %60, %59 : vector<48x256xf32>
    %62 = arith.truncf %61 : vector<48x256xf32> to vector<48x256xbf16>
    %c0_31 = arith.constant 0 : index
    %c0_32 = arith.constant 0 : index
    %63 = vector.load %arg9[%c0_31, %c0_32] : memref<48x512xbf16, #tpu.memory_space<vmem>>, vector<48x256xbf16>
    tpu.vector_store %arg9[%c0_31, %c0_32], %62 {strides = array<i32>} : memref<48x512xbf16, #tpu.memory_space<vmem>>, vector<48x256xbf16>,
    %c0_33 = arith.constant 0 : index
    %c0_34 = arith.constant 0 : index
    %c256 = arith.constant 256 : index
    %64 = vector.load %arg1[%c0_33, %c0_34, %c256] : memref<1x8x512xf32, #tpu.memory_space<vmem>>, vector<1x8x256xf32>
    %65 = vector.shape_cast %64 : vector<1x8x256xf32> to vector<8x256xf32>
    %c0_35 = arith.constant 0 : index
    %c0_36 = arith.constant 0 : index
    %66 = vector.load %arg2[%c0_35, %c0_36] : memref<48x8xbf16, #tpu.memory_space<vmem>>, vector<48x8xbf16>
    %67 = arith.truncf %65 : vector<8x256xf32> to vector<8x256xbf16>
    %cst_37 = arith.constant dense<0.000000e+00> : vector<48x256xf32>
    %68 = tpu.matmul %66, %67, %cst_37 {dimension_numbers = #tpu.dot_dimension_numbers<[1], [0], [0], [1], [0, 0, 1, 1], [], []>} : vector<48x8xbf16>, vector<8x256xbf16>, vector<48x256xf32> -> vector<48x256xf32>
    %c0_38 = arith.constant 0 : index
    %c0_39 = arith.constant 0 : index
    %69 = vector.load %arg3[%c0_38, %c0_39] : memref<48x1xf32, #tpu.memory_space<vmem>>, vector<48x1xf32>
    %70 = vector.broadcast %69 : vector<48x1xf32> to vector<48x256xf32>
    %71 = arith.addf %68, %70 : vector<48x256xf32>
    %cst_40 = arith.constant 0.000000e+00 : f32
    %cst_41 = arith.constant 6.000000e+00 : f32
    %72 = vector.broadcast %cst_40 : f32 to vector<48x256xf32>
    %73 = arith.maximumf %72, %71 : vector<48x256xf32>
    %74 = vector.broadcast %cst_41 : f32 to vector<48x256xf32>
    %75 = arith.minimumf %74, %73 : vector<48x256xf32>
    %c4_42 = arith.constant 4 : index
    %c0_43 = arith.constant 0 : index
    %c0_44 = arith.constant 0 : index
    %76 = vector.load %arg4[%c4_42, %c0_43, %c0_44] : memref<9x48x256xf32, #tpu.memory_space<vmem>>, vector<1x48x256xf32>
    %77 = vector.shape_cast %76 : vector<1x48x256xf32> to vector<48x256xf32>
    %78 = arith.mulf %77, %75 : vector<48x256xf32>
    %c17_i32_45 = arith.constant 17 : i32
    %79 = tpu.dynamic_rotate %75 by %c17_i32_45 dim 1 : vector<48x256xf32>, i32 -> vector<48x256xf32>
    %c0_46 = arith.constant 0 : index
    %c0_47 = arith.constant 0 : index
    %c0_48 = arith.constant 0 : index
    %80 = vector.load %arg4[%c0_46, %c0_47, %c0_48] : memref<9x48x256xf32, #tpu.memory_space<vmem>>, vector<1x48x256xf32>
    %81 = vector.shape_cast %80 : vector<1x48x256xf32> to vector<48x256xf32>
    %82 = arith.mulf %81, %79 : vector<48x256xf32>
    %83 = arith.addf %78, %82 : vector<48x256xf32>
    %c16_i32_49 = arith.constant 16 : i32
    %84 = tpu.dynamic_rotate %75 by %c16_i32_49 dim 1 : vector<48x256xf32>, i32 -> vector<48x256xf32>
    %c1_50 = arith.constant 1 : index
    %c0_51 = arith.constant 0 : index
    %c0_52 = arith.constant 0 : index
    %85 = vector.load %arg4[%c1_50, %c0_51, %c0_52] : memref<9x48x256xf32, #tpu.memory_space<vmem>>, vector<1x48x256xf32>
    %86 = vector.shape_cast %85 : vector<1x48x256xf32> to vector<48x256xf32>
    %87 = arith.mulf %86, %84 : vector<48x256xf32>
    %88 = arith.addf %83, %87 : vector<48x256xf32>
    %c15_i32_53 = arith.constant 15 : i32
    %89 = tpu.dynamic_rotate %75 by %c15_i32_53 dim 1 : vector<48x256xf32>, i32 -> vector<48x256xf32>
    %c2_54 = arith.constant 2 : index
    %c0_55 = arith.constant 0 : index
    %c0_56 = arith.constant 0 : index
    %90 = vector.load %arg4[%c2_54, %c0_55, %c0_56] : memref<9x48x256xf32, #tpu.memory_space<vmem>>, vector<1x48x256xf32>
    %91 = vector.shape_cast %90 : vector<1x48x256xf32> to vector<48x256xf32>
    %92 = arith.mulf %91, %89 : vector<48x256xf32>
    %93 = arith.addf %88, %92 : vector<48x256xf32>
    %c1_i32_57 = arith.constant 1 : i32
    %94 = tpu.dynamic_rotate %75 by %c1_i32_57 dim 1 : vector<48x256xf32>, i32 -> vector<48x256xf32>
    %c3_58 = arith.constant 3 : index
    %c0_59 = arith.constant 0 : index
    %c0_60 = arith.constant 0 : index
    %95 = vector.load %arg4[%c3_58, %c0_59, %c0_60] : memref<9x48x256xf32, #tpu.memory_space<vmem>>, vector<1x48x256xf32>
    %96 = vector.shape_cast %95 : vector<1x48x256xf32> to vector<48x256xf32>
    %97 = arith.mulf %96, %94 : vector<48x256xf32>
    %98 = arith.addf %93, %97 : vector<48x256xf32>
    %c255_i32_61 = arith.constant 255 : i32
    %99 = tpu.dynamic_rotate %75 by %c255_i32_61 dim 1 : vector<48x256xf32>, i32 -> vector<48x256xf32>
    %c5_62 = arith.constant 5 : index
    %c0_63 = arith.constant 0 : index
    %c0_64 = arith.constant 0 : index
    %100 = vector.load %arg4[%c5_62, %c0_63, %c0_64] : memref<9x48x256xf32, #tpu.memory_space<vmem>>, vector<1x48x256xf32>
    %101 = vector.shape_cast %100 : vector<1x48x256xf32> to vector<48x256xf32>
    %102 = arith.mulf %101, %99 : vector<48x256xf32>
    %103 = arith.addf %98, %102 : vector<48x256xf32>
    %c241_i32_65 = arith.constant 241 : i32
    %104 = tpu.dynamic_rotate %75 by %c241_i32_65 dim 1 : vector<48x256xf32>, i32 -> vector<48x256xf32>
    %c6_66 = arith.constant 6 : index
    %c0_67 = arith.constant 0 : index
    %c0_68 = arith.constant 0 : index
    %105 = vector.load %arg4[%c6_66, %c0_67, %c0_68] : memref<9x48x256xf32, #tpu.memory_space<vmem>>, vector<1x48x256xf32>
    %106 = vector.shape_cast %105 : vector<1x48x256xf32> to vector<48x256xf32>
    %107 = arith.mulf %106, %104 : vector<48x256xf32>
    %108 = arith.addf %103, %107 : vector<48x256xf32>
    %c240_i32_69 = arith.constant 240 : i32
    %109 = tpu.dynamic_rotate %75 by %c240_i32_69 dim 1 : vector<48x256xf32>, i32 -> vector<48x256xf32>
    %c7_70 = arith.constant 7 : index
    %c0_71 = arith.constant 0 : index
    %c0_72 = arith.constant 0 : index
    %110 = vector.load %arg4[%c7_70, %c0_71, %c0_72] : memref<9x48x256xf32, #tpu.memory_space<vmem>>, vector<1x48x256xf32>
    %111 = vector.shape_cast %110 : vector<1x48x256xf32> to vector<48x256xf32>
    %112 = arith.mulf %111, %109 : vector<48x256xf32>
    %113 = arith.addf %108, %112 : vector<48x256xf32>
    %c239_i32_73 = arith.constant 239 : i32
    %114 = tpu.dynamic_rotate %75 by %c239_i32_73 dim 1 : vector<48x256xf32>, i32 -> vector<48x256xf32>
    %c8_74 = arith.constant 8 : index
    %c0_75 = arith.constant 0 : index
    %c0_76 = arith.constant 0 : index
    %115 = vector.load %arg4[%c8_74, %c0_75, %c0_76] : memref<9x48x256xf32, #tpu.memory_space<vmem>>, vector<1x48x256xf32>
    %116 = vector.shape_cast %115 : vector<1x48x256xf32> to vector<48x256xf32>
    %117 = arith.mulf %116, %114 : vector<48x256xf32>
    %118 = arith.addf %113, %117 : vector<48x256xf32>
    %c0_77 = arith.constant 0 : index
    %c0_78 = arith.constant 0 : index
    %119 = vector.load %arg5[%c0_77, %c0_78] : memref<48x1xf32, #tpu.memory_space<vmem>>, vector<48x1xf32>
    %120 = vector.broadcast %119 : vector<48x1xf32> to vector<48x256xf32>
    %121 = arith.addf %118, %120 : vector<48x256xf32>
    %cst_79 = arith.constant 0.000000e+00 : f32
    %cst_80 = arith.constant 6.000000e+00 : f32
    %122 = vector.broadcast %cst_79 : f32 to vector<48x256xf32>
    %123 = arith.maximumf %122, %121 : vector<48x256xf32>
    %124 = vector.broadcast %cst_80 : f32 to vector<48x256xf32>
    %125 = arith.minimumf %124, %123 : vector<48x256xf32>
    %126 = arith.truncf %125 : vector<48x256xf32> to vector<48x256xbf16>
    %c0_81 = arith.constant 0 : index
    %c256_82 = arith.constant 256 : index
    %127 = vector.load %arg9[%c0_81, %c256_82] : memref<48x512xbf16, #tpu.memory_space<vmem>>, vector<48x256xbf16>
    tpu.vector_store %arg9[%c0_81, %c256_82], %126 {strides = array<i32>} : memref<48x512xbf16, #tpu.memory_space<vmem>>, vector<48x256xbf16>,
    %c0_83 = arith.constant 0 : index
    %c0_84 = arith.constant 0 : index
    %128 = vector.load %arg6[%c0_83, %c0_84] : memref<8x48xbf16, #tpu.memory_space<vmem>>, vector<8x48xbf16>
    %c0_85 = arith.constant 0 : index
    %c0_86 = arith.constant 0 : index
    %129 = vector.load %arg9[%c0_85, %c0_86] : memref<48x512xbf16, #tpu.memory_space<vmem>>, vector<48x512xbf16>
    %cst_87 = arith.constant dense<0.000000e+00> : vector<8x512xf32>
    %130 = tpu.matmul %128, %129, %cst_87 {dimension_numbers = #tpu.dot_dimension_numbers<[1], [0], [0], [1], [0, 0, 1, 1], [], []>} : vector<8x48xbf16>, vector<48x512xbf16>, vector<8x512xf32> -> vector<8x512xf32>
    %c0_88 = arith.constant 0 : index
    %c0_89 = arith.constant 0 : index
    %131 = vector.load %arg7[%c0_88, %c0_89] : memref<8x1xf32, #tpu.memory_space<vmem>>, vector<8x1xf32>
    %132 = vector.broadcast %131 : vector<8x1xf32> to vector<8x512xf32>
    %133 = arith.addf %130, %132 : vector<8x512xf32>
    %c0_90 = arith.constant 0 : index
    %c0_91 = arith.constant 0 : index
    %c0_92 = arith.constant 0 : index
    %134 = vector.load %arg1[%c0_90, %c0_91, %c0_92] : memref<1x8x512xf32, #tpu.memory_space<vmem>>, vector<1x8x512xf32>
    %135 = vector.shape_cast %134 : vector<1x8x512xf32> to vector<8x512xf32>
    %136 = arith.addf %133, %135 : vector<8x512xf32>
    %c0_93 = arith.constant 0 : index
    %c0_94 = arith.constant 0 : index
    %c0_95 = arith.constant 0 : index
    %137 = vector.load %arg8[%c0_93, %c0_94, %c0_95] : memref<1x8x512xf32, #tpu.memory_space<vmem>>, vector<1x8x512xf32>
    %138 = vector.shape_cast %137 : vector<1x8x512xf32> to vector<8x512xf32>
    %139 = vector.shape_cast %136 : vector<8x512xf32> to vector<1x8x512xf32>
    tpu.vector_store %arg8[%c0_93, %c0_94, %c0_95], %139 {strides = array<i32>} : memref<1x8x512xf32, #tpu.memory_space<vmem>>, vector<1x8x512xf32>,
    return
  }
  func.func @transform_0(%arg0: i32) -> (i32, i32, i32) {
    %c0_i32 = arith.constant 0 : i32
    %c0_i32_0 = arith.constant 0 : i32
    %c0_i32_1 = arith.constant 0 : i32
    return %arg0, %c0_i32, %c0_i32_0 : i32, i32, i32
  }
  func.func @transform_1(%arg0: i32) -> (i32, i32) {
    %c0_i32 = arith.constant 0 : i32
    %c0_i32_0 = arith.constant 0 : i32
    %c0_i32_1 = arith.constant 0 : i32
    return %c0_i32, %c0_i32_0 : i32, i32
  }
  func.func @transform_2(%arg0: i32) -> (i32, i32) {
    %c0_i32 = arith.constant 0 : i32
    %c0_i32_0 = arith.constant 0 : i32
    %c0_i32_1 = arith.constant 0 : i32
    return %c0_i32, %c0_i32_0 : i32, i32
  }
  func.func @transform_3(%arg0: i32) -> (i32, i32, i32) {
    %c0_i32 = arith.constant 0 : i32
    %c0_i32_0 = arith.constant 0 : i32
    %c0_i32_1 = arith.constant 0 : i32
    %c0_i32_2 = arith.constant 0 : i32
    return %c0_i32, %c0_i32_0, %c0_i32_1 : i32, i32, i32
  }
  func.func @transform_4(%arg0: i32) -> (i32, i32) {
    %c0_i32 = arith.constant 0 : i32
    %c0_i32_0 = arith.constant 0 : i32
    %c0_i32_1 = arith.constant 0 : i32
    return %c0_i32, %c0_i32_0 : i32, i32
  }
  func.func @transform_5(%arg0: i32) -> (i32, i32) {
    %c0_i32 = arith.constant 0 : i32
    %c0_i32_0 = arith.constant 0 : i32
    %c0_i32_1 = arith.constant 0 : i32
    return %c0_i32, %c0_i32_0 : i32, i32
  }
  func.func @transform_6(%arg0: i32) -> (i32, i32) {
    %c0_i32 = arith.constant 0 : i32
    %c0_i32_0 = arith.constant 0 : i32
    %c0_i32_1 = arith.constant 0 : i32
    return %c0_i32, %c0_i32_0 : i32, i32
  }
  func.func @transform_7(%arg0: i32) -> (i32, i32, i32) {
    %c0_i32 = arith.constant 0 : i32
    %c0_i32_0 = arith.constant 0 : i32
    %c0_i32_1 = arith.constant 0 : i32
    return %arg0, %c0_i32, %c0_i32_0 : i32, i32, i32
  }
}

</mosaic_0001>

<llo_original>
// kernel: tpu_custom_call.1
$region0: #{tpu_custom_call.1}
  #allocation0 [shape = 'u32[]', space=smem, size = 0x4, offset = 0x4, fixed_abs, tag = 'smem constant byte address 0x4 - core index']
  #allocation1 [shape = 'u32[144,128]{1,0:T(1,128)}', space=vmem, size = 0x12000, scoped, tag = 'internal scratch']
  #allocation2 [shape = 'bf16[48,512]{1,0:T(16,128)(2,1)}', space=vmem, size = 0xc000, scoped, tag = 'scratch operand']
  %s0 = inlined_call_operand.vmem [shape: f32[1,8,512], index: 0, kind: input, shape index: {}]
  %s1 = inlined_call_operand.vmem [shape: bf16[48,8], index: 1, kind: input, shape index: {}]
  %s2 = inlined_call_operand.vmem [shape: f32[48,1], index: 2, kind: input, shape index: {}]
  %s3 = inlined_call_operand.hbm [shape: f32[9,48,256], index: 3, kind: input, shape index: {}]
  %s4 = inlined_call_operand.vmem [shape: f32[48,1], index: 4, kind: input, shape index: {}]
  %s5 = inlined_call_operand.vmem [shape: bf16[8,48], index: 5, kind: input, shape index: {}]
  %s6 = inlined_call_operand.vmem [shape: f32[8,1], index: 6, kind: input, shape index: {}]
  %s7 = inlined_call_operand.hbm [shape: f32[1,8,512], index: 7, kind: output, shape index: {}]
  %s8 = sld [smem:[#allocation0]]
  $region42: #{tpu_custom_call.1} parent=0
    _
  %s10 = ssub.s32 1, %s8
  %s11 = scalar_select 0, %s10, %s8
  $region1: #{tpu_custom_call.1} parent=0
    #allocation3 [shape = 'u8[442368]{0}', space=vmem, size = 0x6c000, scoped, tag = 'input window, operand 3, single buffered']
    #allocation4 [shape = 's32[1]{0}', space=sflag, size = 0x4, scoped, tag = 'scoped memory for tpu_custom_call.1']
    #allocation5 [shape = 's32[1]{0}', space=sflag, size = 0x4, scoped, tag = 'scoped memory for tpu_custom_call.1']
    #allocation6 [shape = 'u8[16384]{0}', space=vmem, size = 0x4000, scoped, tag = 'output window, operand 0, single buffered']
    %12 = vsyncpa [#allocation4], 0
    %13 = vsyncpa [#allocation5], 0
    // Predicated region
    $region2: #{tpu_custom_call.1} parent=1 // pred_check
      _
    $region3: #{tpu_custom_call.1} parent=1 // pred_check_branch
      %15 = sbr.rel (0) target = $region5
    $region4: #{tpu_custom_call.1} parent=1 // pred_region
      _
    $region5: #{tpu_custom_call.1} parent=1 // pred_fallthru
      _
    // Predicated region
    $region6: #{tpu_custom_call.1} parent=1 // pred_check
      _
    $region7: #{tpu_custom_call.1} parent=1 // pred_check_branch
      %17 = sbr.rel (0) target = $region9
    $region8: #{tpu_custom_call.1} parent=1 // pred_region
      _
    $region9: #{tpu_custom_call.1} parent=1 // pred_fallthru
      _
    // Predicated region
    $region10: #{tpu_custom_call.1} parent=1 // pred_check
      _
    $region11: #{tpu_custom_call.1} parent=1 // pred_check_branch
      %19 = sbr.rel (0) target = $region13
    $region12: #{tpu_custom_call.1} parent=1 // pred_region
      _
    $region13: #{tpu_custom_call.1} parent=1 // pred_fallthru
      _
    // Predicated region
    $region14: #{tpu_custom_call.1} parent=1 // pred_check
      _
    $region15: #{tpu_custom_call.1} parent=1 // pred_check_branch
      %21 = sbr.rel (0) target = $region17
    $region16: #{tpu_custom_call.1} parent=1 // pred_region
      %s23 = ssub.s32 13824, 13824
      %24 = vsyncadd [#allocation4], %s23
      %s25 = sshll.u32 [#allocation3], 4
      %s26 = int_to_ptr.vmem [resolvable:$true] %s25
      %31 = dma.hbm_to_vmem [thread:$0]  %s3, 13824, %s26, [#allocation4], 256, 256, 16
    $region17: #{tpu_custom_call.1} parent=1 // pred_fallthru
      _
    // Predicated region
    $region18: #{tpu_custom_call.1} parent=1 // pred_check
      _
    $region19: #{tpu_custom_call.1} parent=1 // pred_check_branch
      %33 = sbr.rel (0) target = $region21
    $region20: #{tpu_custom_call.1} parent=1 // pred_region
      _
    $region21: #{tpu_custom_call.1} parent=1 // pred_fallthru
      _
    // Predicated region
    $region22: #{tpu_custom_call.1} parent=1 // pred_check
      _
    $region23: #{tpu_custom_call.1} parent=1 // pred_check_branch
      %35 = sbr.rel (0) target = $region25
    $region24: #{tpu_custom_call.1} parent=1 // pred_region
      _
    $region25: #{tpu_custom_call.1} parent=1 // pred_fallthru
      _
    // Predicated region
    $region26: #{tpu_custom_call.1} parent=1 // pred_check
      _
    $region27: #{tpu_custom_call.1} parent=1 // pred_check_branch
      %37 = sbr.rel (0) target = $region29
    $region28: #{tpu_custom_call.1} parent=1 // pred_region
      _
    $region29: #{tpu_custom_call.1} parent=1 // pred_fallthru
      _
    // Predicated region
    $region30: #{tpu_custom_call.1} parent=1 // pred_check
      _
    $region31: #{tpu_custom_call.1} parent=1 // pred_check_branch
      %39 = sbr.rel (0) target = $region33
    $region32: #{tpu_custom_call.1} parent=1 // pred_region
      %40 = dma.done [#allocation4], 13824
    $region33: #{tpu_custom_call.1} parent=1 // pred_fallthru
      _
    %v42 = vld [vmem:[%s0] sm:$0xff]
    %v43 = vld [vmem:[%s0 + $0x8] sm:$0xff]
    %v44 = vld [vmem:[%s1] sm:$0xf]
    %v45 = vld [vmem:[%s1 + $0x4] sm:$0xf]
    %v46 = vld [vmem:[%s1 + $0x8] sm:$0xf]
    %v47 = vld [vmem:[%s1 + $0xc] sm:$0xf]
    %v48 = vld [vmem:[%s1 + $0x10] sm:$0xf]
    %v49 = vld [vmem:[%s1 + $0x14] sm:$0xf]
    %v50 = vpack.c.bf16 %v42, %v42
    %v51 = vpack.c.bf16 %v43, %v43
    %v52 = vld [vmem:[%s2] sm:$0xff]
    %v53 = vld [vmem:[%s2 + $0x8] sm:$0xff]
    %v54 = vld [vmem:[%s2 + $0x10] sm:$0xff]
    %v55 = vld [vmem:[%s2 + $0x18] sm:$0xff]
    %v56 = vld [vmem:[%s2 + $0x20] sm:$0xff]
    %v57 = vld [vmem:[%s2 + $0x28] sm:$0xff]
    %59 = vset.pattern.permute.xlu0 0
    %60 = vperm.xlu0 %59, %v52
    %v61 = vpop.permute.xlu0 %60
    %64 = vset.pattern.permute.xlu0 0
    %65 = vperm.xlu0 %64, %v53
    %v66 = vpop.permute.xlu0 %65
    %69 = vset.pattern.permute.xlu0 0
    %70 = vperm.xlu0 %69, %v54
    %v71 = vpop.permute.xlu0 %70
    %74 = vset.pattern.permute.xlu0 0
    %75 = vperm.xlu0 %74, %v55
    %v76 = vpop.permute.xlu0 %75
    %79 = vset.pattern.permute.xlu0 0
    %80 = vperm.xlu0 %79, %v56
    %v81 = vpop.permute.xlu0 %80
    %84 = vset.pattern.permute.xlu0 0
    %85 = vperm.xlu0 %84, %v57
    %v86 = vpop.permute.xlu0 %85
    %v94 = vunpack.c.l.b16 %v44
    %v95 = vunpack.c.l.b16 %v45
    %v96 = vunpack.c.l.b16 %v46
    %v97 = vunpack.c.l.b16 %v47
    %v98 = vunpack.c.l.b16 %v48
    %v99 = vunpack.c.l.b16 %v49
    %v100 = vpack.c.b16 %v95, %v94
    %v101 = vpack.c.b16 %v97, %v96
    %v102 = vpack.c.b16 %v99, %v98
    %vm103 = vcmask 64512
    %v105 = vsel %vm103, %v100, 0
    %v108 = vsel %vm103, %v101, 0
    %v111 = vsel %vm103, %v102, 0
    %vm113 = vcmask 1043456
    %v115 = vsel %vm113, %v50, 0
    %v118 = vsel %vm113, %v51, 0
    %120 = vmatprep.subr.bf16.mxu0 %v118
    %121 = vmatpush1.bf16.msra.mxu0 %v115
    %122 = vmatprep.subr.bf16.mxu0 0
    %123 = vmatpush1.bf16.msra.mxu0 0
    %124 = vmatprep.subr.bf16.mxu0 0
    %125 = vmatpush1.bf16.msra.mxu0 0
    %126 = vmatprep.subr.bf16.mxu0 0
    %127 = vmatpush1.bf16.msra.mxu0 0
    %128 = vmatprep.subr.bf16.mxu0 0
    %129 = vmatpush1.bf16.msra.mxu0 0
    %130 = vmatprep.subr.bf16.mxu0 0
    %131 = vmatpush1.bf16.msra.mxu0 0
    %132 = vmatprep.subr.bf16.mxu0 0
    %133 = vmatpush1.bf16.msra.mxu0 0
    %134 = vmatprep.subr.bf16.mxu0 0
    %135 = vmatpush1.bf16.msra.mxu0 0
    %136 = vmatprep.subr.bf16.mxu0 0
    %137 = vmatpush1.bf16.msra.mxu0 0
    %138 = vmatprep.subr.bf16.mxu0 0
    %139 = vmatpush1.bf16.msra.mxu0 0
    %140 = vmatprep.subr.bf16.mxu0 0
    %141 = vmatpush1.bf16.msra.mxu0 0
    %142 = vmatprep.subr.bf16.mxu0 0
    %143 = vmatpush1.bf16.msra.mxu0 0
    %144 = vmatprep.subr.bf16.mxu0 0
    %145 = vmatpush1.bf16.msra.mxu0 0
    %146 = vmatprep.subr.bf16.mxu0 0
    %147 = vmatpush1.bf16.msra.mxu0 0
    %148 = vmatprep.subr.bf16.mxu0 0
    %149 = vmatpush1.bf16.msra.mxu0 0
    %150 = vmatprep.subr.bf16.mxu0 0
    %151 = vmatpush1.bf16.msra.mxu0 0
    %152 = vmatprep.mubr.bf16.mxu0 0
    %153 = vmatmul.mubr.bf16.gmra.mrb[0].mxu0 %v105
    %v154 = vpop.f32.mrb[0].mxu0
    %v155 = vadd.f32 %v61, %v154
    %v156 = vpop.f32.mrb[0].mxu0
    %v157 = vadd.f32 %v61, %v156
    %v158 = vpop.f32.mrb[0].mxu0
    %v159 = vadd.f32 %v66, %v158
    %v160 = vpop.f32.mrb[0].mxu0
    %v161 = vadd.f32 %v66, %v160
    %162 = vmatprep.mubr.bf16.mxu0 0
    %163 = vmatmul.mubr.bf16.gmra.mrb[0].mxu0 %v108
    %v164 = vpop.f32.mrb[0].mxu0
    %v165 = vadd.f32 %v71, %v164
    %v166 = vpop.f32.mrb[0].mxu0
    %v167 = vadd.f32 %v71, %v166
    %v168 = vpop.f32.mrb[0].mxu0
    %v169 = vadd.f32 %v76, %v168
    %v170 = vpop.f32.mrb[0].mxu0
    %v171 = vadd.f32 %v76, %v170
    %172 = vmatprep.mubr.bf16.mxu0 0
    %173 = vmatmul.mubr.bf16.gmra.mrb[0].mxu0 %v111
    %v174 = vpop.f32.mrb[0].mxu0
    %v175 = vadd.f32 %v81, %v174
    %v176 = vpop.f32.mrb[0].mxu0
    %v177 = vadd.f32 %v81, %v176
    %v178 = vpop.f32.mrb[0].mxu0
    %v179 = vadd.f32 %v86, %v178
    %v180 = vpop.f32.mrb[0].mxu0
    %v181 = vadd.f32 %v86, %v180
    %182 = vdwg.mxu0
    %v183 = vmax.f32 %v155, 0.0
    %v184 = vmax.f32 %v157, 0.0
    %v185 = vmax.f32 %v159, 0.0
    %v186 = vmax.f32 %v161, 0.0
    %v187 = vmax.f32 %v165, 0.0
    %v188 = vmax.f32 %v167, 0.0
    %v189 = vmax.f32 %v169, 0.0
    %v190 = vmax.f32 %v171, 0.0
    %v191 = vmax.f32 %v175, 0.0
    %v192 = vmax.f32 %v177, 0.0
    %v193 = vmax.f32 %v179, 0.0
    %v194 = vmax.f32 %v181, 0.0
    %v195 = vmin.f32 %v183, 6.0
    %v196 = vmin.f32 %v184, 6.0
    %v197 = vmin.f32 %v185, 6.0
    %v198 = vmin.f32 %v186, 6.0
    %v199 = vmin.f32 %v187, 6.0
    %v200 = vmin.f32 %v188, 6.0
    %v201 = vmin.f32 %v189, 6.0
    %v202 = vmin.f32 %v190, 6.0
    %v203 = vmin.f32 %v191, 6.0
    %v204 = vmin.f32 %v192, 6.0
    %v205 = vmin.f32 %v193, 6.0
    %v206 = vmin.f32 %v194, 6.0
    %s207 = scalar_lea.vmem [#allocation3], 384
    %v208 = vld [vmem:[%s207] sm:$0xff]
    %v209 = vld [vmem:[%s207 + $0x8] sm:$0xff]
    %v210 = vld [vmem:[%s207 + $0x10] sm:$0xff]
    %v211 = vld [vmem:[%s207 + $0x18] sm:$0xff]
    %v212 = vld [vmem:[%s207 + $0x20] sm:$0xff]
    %v213 = vld [vmem:[%s207 + $0x28] sm:$0xff]
    %v214 = vld [vmem:[%s207 + $0x30] sm:$0xff]
    %v215 = vld [vmem:[%s207 + $0x38] sm:$0xff]
    %v216 = vld [vmem:[%s207 + $0x40] sm:$0xff]
    %v217 = vld [vmem:[%s207 + $0x48] sm:$0xff]
    %v218 = vld [vmem:[%s207 + $0x50] sm:$0xff]
    %v219 = vld [vmem:[%s207 + $0x58] sm:$0xff]
    %v220 = vmul.f32 %v208, %v195
    %v221 = vmul.f32 %v209, %v196
    %v222 = vmul.f32 %v210, %v197
    %v223 = vmul.f32 %v211, %v198
    %v224 = vmul.f32 %v212, %v199
    %v225 = vmul.f32 %v213, %v200
    %v226 = vmul.f32 %v214, %v201
    %v227 = vmul.f32 %v215, %v202
    %v228 = vmul.f32 %v216, %v203
    %v229 = vmul.f32 %v217, %v204
    %v230 = vmul.f32 %v218, %v205
    %v231 = vmul.f32 %v219, %v206
    %232 = vrot.lane.b32.xlu0 %v195, 17
    %v233 = vpop.permute.xlu0 %232
    %234 = vrot.lane.b32.xlu0 %v197, 17
    %v235 = vpop.permute.xlu0 %234
    %236 = vrot.lane.b32.xlu0 %v199, 17
    %v237 = vpop.permute.xlu0 %236
    %238 = vrot.lane.b32.xlu0 %v201, 17
    %v239 = vpop.permute.xlu0 %238
    %240 = vrot.lane.b32.xlu0 %v203, 17
    %v241 = vpop.permute.xlu0 %240
    %242 = vrot.lane.b32.xlu0 %v205, 17
    %v243 = vpop.permute.xlu0 %242
    %244 = vrot.lane.b32.xlu0 %v196, 17
    %v245 = vpop.permute.xlu0 %244
    %246 = vrot.lane.b32.xlu0 %v198, 17
    %v247 = vpop.permute.xlu0 %246
    %248 = vrot.lane.b32.xlu0 %v200, 17
    %v249 = vpop.permute.xlu0 %248
    %250 = vrot.lane.b32.xlu0 %v202, 17
    %v251 = vpop.permute.xlu0 %250
    %252 = vrot.lane.b32.xlu0 %v204, 17
    %v253 = vpop.permute.xlu0 %252
    %254 = vrot.lane.b32.xlu0 %v206, 17
    %v255 = vpop.permute.xlu0 %254
    %v256 = vlaneseq
    %v257 = vand.u32 %v256, 127
    %vm258 = vcmp.lt.s32.totalorder %v257, 17
    %v259 = vsel %vm258, %v233, %v245
    %v260 = vsel %vm258, %v235, %v247
    %v261 = vsel %vm258, %v237, %v249
    %v262 = vsel %vm258, %v239, %v251
    %v263 = vsel %vm258, %v241, %v253
    %v264 = vsel %vm258, %v243, %v255
    %v265 = vsel %vm258, %v245, %v233
    %v266 = vsel %vm258, %v247, %v235
    %v267 = vsel %vm258, %v249, %v237
    %v268 = vsel %vm258, %v251, %v239
    %v269 = vsel %vm258, %v253, %v241
    %v270 = vsel %vm258, %v255, %v243
    %v271 = vld [vmem:[#allocation3] sm:$0xff]
    %v272 = vld [vmem:[#allocation3 + $0x8] sm:$0xff]
    %v273 = vld [vmem:[#allocation3 + $0x10] sm:$0xff]
    %v274 = vld [vmem:[#allocation3 + $0x18] sm:$0xff]
    %v275 = vld [vmem:[#allocation3 + $0x20] sm:$0xff]
    %v276 = vld [vmem:[#allocation3 + $0x28] sm:$0xff]
    %v277 = vld [vmem:[#allocation3 + $0x30] sm:$0xff]
    %v278 = vld [vmem:[#allocation3 + $0x38] sm:$0xff]
    %v279 = vld [vmem:[#allocation3 + $0x40] sm:$0xff]
    %v280 = vld [vmem:[#allocation3 + $0x48] sm:$0xff]
    %v281 = vld [vmem:[#allocation3 + $0x50] sm:$0xff]
    %v282 = vld [vmem:[#allocation3 + $0x58] sm:$0xff]
    %v283 = vmul.f32 %v271, %v265
    %v284 = vmul.f32 %v272, %v259
    %v285 = vmul.f32 %v273, %v266
    %v286 = vmul.f32 %v274, %v260
    %v287 = vmul.f32 %v275, %v267
    %v288 = vmul.f32 %v276, %v261
    %v289 = vmul.f32 %v277, %v268
    %v290 = vmul.f32 %v278, %v262
    %v291 = vmul.f32 %v279, %v269
    %v292 = vmul.f32 %v280, %v263
    %v293 = vmul.f32 %v281, %v270
    %v294 = vmul.f32 %v282, %v264
    %v295 = vadd.f32 %v220, %v283
    %v296 = vadd.f32 %v221, %v284
    %v297 = vadd.f32 %v222, %v285
    %v298 = vadd.f32 %v223, %v286
    %v299 = vadd.f32 %v224, %v287
    %v300 = vadd.f32 %v225, %v288
    %v301 = vadd.f32 %v226, %v289
    %v302 = vadd.f32 %v227, %v290
    %v303 = vadd.f32 %v228, %v291
    %v304 = vadd.f32 %v229, %v292
    %v305 = vadd.f32 %v230, %v293
    %v306 = vadd.f32 %v231, %v294
    %307 = vrot.lane.b32.xlu0 %v195, 16
    %v308 = vpop.permute.xlu0 %307
    %309 = vrot.lane.b32.xlu0 %v197, 16
    %v310 = vpop.permute.xlu0 %309
    %311 = vrot.lane.b32.xlu0 %v199, 16
    %v312 = vpop.permute.xlu0 %311
    %313 = vrot.lane.b32.xlu0 %v201, 16
    %v314 = vpop.permute.xlu0 %313
    %315 = vrot.lane.b32.xlu0 %v203, 16
    %v316 = vpop.permute.xlu0 %315
    %317 = vrot.lane.b32.xlu0 %v205, 16
    %v318 = vpop.permute.xlu0 %317
    %319 = vrot.lane.b32.xlu0 %v196, 16
    %v320 = vpop.permute.xlu0 %319
    %321 = vrot.lane.b32.xlu0 %v198, 16
    %v322 = vpop.permute.xlu0 %321
    %323 = vrot.lane.b32.xlu0 %v200, 16
    %v324 = vpop.permute.xlu0 %323
    %325 = vrot.lane.b32.xlu0 %v202, 16
    %v326 = vpop.permute.xlu0 %325
    %327 = vrot.lane.b32.xlu0 %v204, 16
    %v328 = vpop.permute.xlu0 %327
    %329 = vrot.lane.b32.xlu0 %v206, 16
    %v330 = vpop.permute.xlu0 %329
    %vm331 = vcmp.lt.s32.totalorder %v257, 16
    %v332 = vsel %vm331, %v308, %v320
    %v333 = vsel %vm331, %v310, %v322
    %v334 = vsel %vm331, %v312, %v324
    %v335 = vsel %vm331, %v314, %v326
    %v336 = vsel %vm331, %v316, %v328
    %v337 = vsel %vm331, %v318, %v330
    %v338 = vsel %vm331, %v320, %v308
    %v339 = vsel %vm331, %v322, %v310
    %v340 = vsel %vm331, %v324, %v312
    %v341 = vsel %vm331, %v326, %v314
    %v342 = vsel %vm331, %v328, %v316
    %v343 = vsel %vm331, %v330, %v318
    %s344 = scalar_lea.vmem [#allocation3], 96
    %v345 = vld [vmem:[%s344] sm:$0xff]
    %v346 = vld [vmem:[%s344 + $0x8] sm:$0xff]
    %v347 = vld [vmem:[%s344 + $0x10] sm:$0xff]
    %v348 = vld [vmem:[%s344 + $0x18] sm:$0xff]
    %v349 = vld [vmem:[%s344 + $0x20] sm:$0xff]
    %v350 = vld [vmem:[%s344 + $0x28] sm:$0xff]
    %v351 = vld [vmem:[%s344 + $0x30] sm:$0xff]
    %v352 = vld [vmem:[%s344 + $0x38] sm:$0xff]
    %v353 = vld [vmem:[%s344 + $0x40] sm:$0xff]
    %v354 = vld [vmem:[%s344 + $0x48] sm:$0xff]
    %v355 = vld [vmem:[%s344 + $0x50] sm:$0xff]
    %v356 = vld [vmem:[%s344 + $0x58] sm:$0xff]
    %v357 = vmul.f32 %v345, %v338
    %v358 = vmul.f32 %v346, %v332
    %v359 = vmul.f32 %v347, %v339
    %v360 = vmul.f32 %v348, %v333
    %v361 = vmul.f32 %v349, %v340
    %v362 = vmul.f32 %v350, %v334
    %v363 = vmul.f32 %v351, %v341
    %v364 = vmul.f32 %v352, %v335
    %v365 = vmul.f32 %v353, %v342
    %v366 = vmul.f32 %v354, %v336
    %v367 = vmul.f32 %v355, %v343
    %v368 = vmul.f32 %v356, %v337
    %v369 = vadd.f32 %v295, %v357
    %v370 = vadd.f32 %v296, %v358
    %v371 = vadd.f32 %v297, %v359
    %v372 = vadd.f32 %v298, %v360
    %v373 = vadd.f32 %v299, %v361
    %v374 = vadd.f32 %v300, %v362
    %v375 = vadd.f32 %v301, %v363
    %v376 = vadd.f32 %v302, %v364
    %v377 = vadd.f32 %v303, %v365
    %v378 = vadd.f32 %v304, %v366
    %v379 = vadd.f32 %v305, %v367
    %v380 = vadd.f32 %v306, %v368
    %381 = vrot.lane.b32.xlu0 %v195, 15
    %v382 = vpop.permute.xlu0 %381
    %383 = vrot.lane.b32.xlu0 %v197, 15
    %v384 = vpop.permute.xlu0 %383
    %385 = vrot.lane.b32.xlu0 %v199, 15
    %v386 = vpop.permute.xlu0 %385
    %387 = vrot.lane.b32.xlu0 %v201, 15
    %v388 = vpop.permute.xlu0 %387
    %389 = vrot.lane.b32.xlu0 %v203, 15
    %v390 = vpop.permute.xlu0 %389
    %391 = vrot.lane.b32.xlu0 %v205, 15
    %v392 = vpop.permute.xlu0 %391
    %393 = vrot.lane.b32.xlu0 %v196, 15
    %v394 = vpop.permute.xlu0 %393
    %395 = vrot.lane.b32.xlu0 %v198, 15
    %v396 = vpop.permute.xlu0 %395
    %397 = vrot.lane.b32.xlu0 %v200, 15
    %v398 = vpop.permute.xlu0 %397
    %399 = vrot.lane.b32.xlu0 %v202, 15
    %v400 = vpop.permute.xlu0 %399
    %401 = vrot.lane.b32.xlu0 %v204, 15
    %v402 = vpop.permute.xlu0 %401
    %403 = vrot.lane.b32.xlu0 %v206, 15
    %v404 = vpop.permute.xlu0 %403
    %vm405 = vcmp.lt.s32.totalorder %v257, 15
    %v406 = vsel %vm405, %v382, %v394
    %v407 = vsel %vm405, %v384, %v396
    %v408 = vsel %vm405, %v386, %v398
    %v409 = vsel %vm405, %v388, %v400
    %v410 = vsel %vm405, %v390, %v402
    %v411 = vsel %vm405, %v392, %v404
    %v412 = vsel %vm405, %v394, %v382
    %v413 = vsel %vm405, %v396, %v384
    %v414 = vsel %vm405, %v398, %v386
    %v415 = vsel %vm405, %v400, %v388
    %v416 = vsel %vm405, %v402, %v390
    %v417 = vsel %vm405, %v404, %v392
    %s418 = scalar_lea.vmem [#allocation3], 192
    %v419 = vld [vmem:[%s418] sm:$0xff]
    %v420 = vld [vmem:[%s418 + $0x8] sm:$0xff]
    %v421 = vld [vmem:[%s418 + $0x10] sm:$0xff]
    %v422 = vld [vmem:[%s418 + $0x18] sm:$0xff]
    %v423 = vld [vmem:[%s418 + $0x20] sm:$0xff]
    %v424 = vld [vmem:[%s418 + $0x28] sm:$0xff]
    %v425 = vld [vmem:[%s418 + $0x30] sm:$0xff]
    %v426 = vld [vmem:[%s418 + $0x38] sm:$0xff]
    %v427 = vld [vmem:[%s418 + $0x40] sm:$0xff]
    %v428 = vld [vmem:[%s418 + $0x48] sm:$0xff]
    %v429 = vld [vmem:[%s418 + $0x50] sm:$0xff]
    %v430 = vld [vmem:[%s418 + $0x58] sm:$0xff]
    %v431 = vmul.f32 %v419, %v412
    %v432 = vmul.f32 %v420, %v406
    %v433 = vmul.f32 %v421, %v413
    %v434 = vmul.f32 %v422, %v407
    %v435 = vmul.f32 %v423, %v414
    %v436 = vmul.f32 %v424, %v408
    %v437 = vmul.f32 %v425, %v415
    %v438 = vmul.f32 %v426, %v409
    %v439 = vmul.f32 %v427, %v416
    %v440 = vmul.f32 %v428, %v410
    %v441 = vmul.f32 %v429, %v417
    %v442 = vmul.f32 %v430, %v411
    %v443 = vadd.f32 %v369, %v431
    %v444 = vadd.f32 %v370, %v432
    %v445 = vadd.f32 %v371, %v433
    %v446 = vadd.f32 %v372, %v434
    %v447 = vadd.f32 %v373, %v435
    %v448 = vadd.f32 %v374, %v436
    %v449 = vadd.f32 %v375, %v437
    %v450 = vadd.f32 %v376, %v438
    %v451 = vadd.f32 %v377, %v439
    %v452 = vadd.f32 %v378, %v440
    %v453 = vadd.f32 %v379, %v441
    %v454 = vadd.f32 %v380, %v442
    %455 = vrot.lane.b32.xlu0 %v195, 1
    %v456 = vpop.permute.xlu0 %455
    %457 = vrot.lane.b32.xlu0 %v197, 1
    %v458 = vpop.permute.xlu0 %457
    %459 = vrot.lane.b32.xlu0 %v199, 1
    %v460 = vpop.permute.xlu0 %459
    %461 = vrot.lane.b32.xlu0 %v201, 1
    %v462 = vpop.permute.xlu0 %461
    %463 = vrot.lane.b32.xlu0 %v203, 1
    %v464 = vpop.permute.xlu0 %463
    %465 = vrot.lane.b32.xlu0 %v205, 1
    %v466 = vpop.permute.xlu0 %465
    %467 = vrot.lane.b32.xlu0 %v196, 1
    %v468 = vpop.permute.xlu0 %467
    %469 = vrot.lane.b32.xlu0 %v198, 1
    %v470 = vpop.permute.xlu0 %469
    %471 = vrot.lane.b32.xlu0 %v200, 1
    %v472 = vpop.permute.xlu0 %471
    %473 = vrot.lane.b32.xlu0 %v202, 1
    %v474 = vpop.permute.xlu0 %473
    %475 = vrot.lane.b32.xlu0 %v204, 1
    %v476 = vpop.permute.xlu0 %475
    %477 = vrot.lane.b32.xlu0 %v206, 1
    %v478 = vpop.permute.xlu0 %477
    %vm479 = vcmp.lt.s32.totalorder %v257, 1
    %v480 = vsel %vm479, %v456, %v468
    %v481 = vsel %vm479, %v458, %v470
    %v482 = vsel %vm479, %v460, %v472
    %v483 = vsel %vm479, %v462, %v474
    %v484 = vsel %vm479, %v464, %v476
    %v485 = vsel %vm479, %v466, %v478
    %v486 = vsel %vm479, %v468, %v456
    %v487 = vsel %vm479, %v470, %v458
    %v488 = vsel %vm479, %v472, %v460
    %v489 = vsel %vm479, %v474, %v462
    %v490 = vsel %vm479, %v476, %v464
    %v491 = vsel %vm479, %v478, %v466
    %s492 = scalar_lea.vmem [#allocation3], 288
    %v493 = vld [vmem:[%s492] sm:$0xff]
    %v494 = vld [vmem:[%s492 + $0x8] sm:$0xff]
    %v495 = vld [vmem:[%s492 + $0x10] sm:$0xff]
    %v496 = vld [vmem:[%s492 + $0x18] sm:$0xff]
    %v497 = vld [vmem:[%s492 + $0x20] sm:$0xff]
    %v498 = vld [vmem:[%s492 + $0x28] sm:$0xff]
    %v499 = vld [vmem:[%s492 + $0x30] sm:$0xff]
    %v500 = vld [vmem:[%s492 + $0x38] sm:$0xff]
    %v501 = vld [vmem:[%s492 + $0x40] sm:$0xff]
    %v502 = vld [vmem:[%s492 + $0x48] sm:$0xff]
    %v503 = vld [vmem:[%s492 + $0x50] sm:$0xff]
    %v504 = vld [vmem:[%s492 + $0x58] sm:$0xff]
    %v505 = vmul.f32 %v493, %v486
    %v506 = vmul.f32 %v494, %v480
    %v507 = vmul.f32 %v495, %v487
    %v508 = vmul.f32 %v496, %v481
    %v509 = vmul.f32 %v497, %v488
    %v510 = vmul.f32 %v498, %v482
    %v511 = vmul.f32 %v499, %v489
    %v512 = vmul.f32 %v500, %v483
    %v513 = vmul.f32 %v501, %v490
    %v514 = vmul.f32 %v502, %v484
    %v515 = vmul.f32 %v503, %v491
    %v516 = vmul.f32 %v504, %v485
    %v517 = vadd.f32 %v443, %v505
    %v518 = vadd.f32 %v444, %v506
    %v519 = vadd.f32 %v445, %v507
    %v520 = vadd.f32 %v446, %v508
    %v521 = vadd.f32 %v447, %v509
    %v522 = vadd.f32 %v448, %v510
    %v523 = vadd.f32 %v449, %v511
    %v524 = vadd.f32 %v450, %v512
    %v525 = vadd.f32 %v451, %v513
    %v526 = vadd.f32 %v452, %v514
    %v527 = vadd.f32 %v453, %v515
    %v528 = vadd.f32 %v454, %v516
    %529 = vrot.lane.b32.xlu0 %v195, 127
    %v530 = vpop.permute.xlu0 %529
    %531 = vrot.lane.b32.xlu0 %v197, 127
    %v532 = vpop.permute.xlu0 %531
    %533 = vrot.lane.b32.xlu0 %v199, 127
    %v534 = vpop.permute.xlu0 %533
    %535 = vrot.lane.b32.xlu0 %v201, 127
    %v536 = vpop.permute.xlu0 %535
    %537 = vrot.lane.b32.xlu0 %v203, 127
    %v538 = vpop.permute.xlu0 %537
    %539 = vrot.lane.b32.xlu0 %v205, 127
    %v540 = vpop.permute.xlu0 %539
    %541 = vrot.lane.b32.xlu0 %v196, 127
    %v542 = vpop.permute.xlu0 %541
    %543 = vrot.lane.b32.xlu0 %v198, 127
    %v544 = vpop.permute.xlu0 %543
    %545 = vrot.lane.b32.xlu0 %v200, 127
    %v546 = vpop.permute.xlu0 %545
    %547 = vrot.lane.b32.xlu0 %v202, 127
    %v548 = vpop.permute.xlu0 %547
    %549 = vrot.lane.b32.xlu0 %v204, 127
    %v550 = vpop.permute.xlu0 %549
    %551 = vrot.lane.b32.xlu0 %v206, 127
    %v552 = vpop.permute.xlu0 %551
    %vm553 = vcmp.lt.s32.totalorder %v257, 127
    %v554 = vsel %vm553, %v530, %v542
    %v555 = vsel %vm553, %v532, %v544
    %v556 = vsel %vm553, %v534, %v546
    %v557 = vsel %vm553, %v536, %v548
    %v558 = vsel %vm553, %v538, %v550
    %v559 = vsel %vm553, %v540, %v552
    %v560 = vsel %vm553, %v542, %v530
    %v561 = vsel %vm553, %v544, %v532
    %v562 = vsel %vm553, %v546, %v534
    %v563 = vsel %vm553, %v548, %v536
    %v564 = vsel %vm553, %v550, %v538
    %v565 = vsel %vm553, %v552, %v540
    %s566 = scalar_lea.vmem [#allocation3], 480
    %v567 = vld [vmem:[%s566] sm:$0xff]
    %v568 = vld [vmem:[%s566 + $0x8] sm:$0xff]
    %v569 = vld [vmem:[%s566 + $0x10] sm:$0xff]
    %v570 = vld [vmem:[%s566 + $0x18] sm:$0xff]
    %v571 = vld [vmem:[%s566 + $0x20] sm:$0xff]
    %v572 = vld [vmem:[%s566 + $0x28] sm:$0xff]
    %v573 = vld [vmem:[%s566 + $0x30] sm:$0xff]
    %v574 = vld [vmem:[%s566 + $0x38] sm:$0xff]
    %v575 = vld [vmem:[%s566 + $0x40] sm:$0xff]
    %v576 = vld [vmem:[%s566 + $0x48] sm:$0xff]
    %v577 = vld [vmem:[%s566 + $0x50] sm:$0xff]
    %v578 = vld [vmem:[%s566 + $0x58] sm:$0xff]
    %v579 = vmul.f32 %v567, %v554
    %v580 = vmul.f32 %v568, %v560
    %v581 = vmul.f32 %v569, %v555
    %v582 = vmul.f32 %v570, %v561
    %v583 = vmul.f32 %v571, %v556
    %v584 = vmul.f32 %v572, %v562
    %v585 = vmul.f32 %v573, %v557
    %v586 = vmul.f32 %v574, %v563
    %v587 = vmul.f32 %v575, %v558
    %v588 = vmul.f32 %v576, %v564
    %v589 = vmul.f32 %v577, %v559
    %v590 = vmul.f32 %v578, %v565
    %v591 = vadd.f32 %v517, %v579
    %v592 = vadd.f32 %v518, %v580
    %v593 = vadd.f32 %v519, %v581
    %v594 = vadd.f32 %v520, %v582
    %v595 = vadd.f32 %v521, %v583
    %v596 = vadd.f32 %v522, %v584
    %v597 = vadd.f32 %v523, %v585
    %v598 = vadd.f32 %v524, %v586
    %v599 = vadd.f32 %v525, %v587
    %v600 = vadd.f32 %v526, %v588
    %v601 = vadd.f32 %v527, %v589
    %v602 = vadd.f32 %v528, %v590
    %603 = vrot.lane.b32.xlu0 %v195, 113
    %v604 = vpop.permute.xlu0 %603
    %605 = vrot.lane.b32.xlu0 %v197, 113
    %v606 = vpop.permute.xlu0 %605
    %607 = vrot.lane.b32.xlu0 %v199, 113
    %v608 = vpop.permute.xlu0 %607
    %609 = vrot.lane.b32.xlu0 %v201, 113
    %v610 = vpop.permute.xlu0 %609
    %611 = vrot.lane.b32.xlu0 %v203, 113
    %v612 = vpop.permute.xlu0 %611
    %613 = vrot.lane.b32.xlu0 %v205, 113
    %v614 = vpop.permute.xlu0 %613
    %615 = vrot.lane.b32.xlu0 %v196, 113
    %v616 = vpop.permute.xlu0 %615
    %617 = vrot.lane.b32.xlu0 %v198, 113
    %v618 = vpop.permute.xlu0 %617
    %619 = vrot.lane.b32.xlu0 %v200, 113
    %v620 = vpop.permute.xlu0 %619
    %621 = vrot.lane.b32.xlu0 %v202, 113
    %v622 = vpop.permute.xlu0 %621
    %623 = vrot.lane.b32.xlu0 %v204, 113
    %v624 = vpop.permute.xlu0 %623
    %625 = vrot.lane.b32.xlu0 %v206, 113
    %v626 = vpop.permute.xlu0 %625
    %vm627 = vcmp.lt.s32.totalorder %v257, 113
    %v628 = vsel %vm627, %v604, %v616
    %v629 = vsel %vm627, %v606, %v618
    %v630 = vsel %vm627, %v608, %v620
    %v631 = vsel %vm627, %v610, %v622
    %v632 = vsel %vm627, %v612, %v624
    %v633 = vsel %vm627, %v614, %v626
    %v634 = vsel %vm627, %v616, %v604
    %v635 = vsel %vm627, %v618, %v606
    %v636 = vsel %vm627, %v620, %v608
    %v637 = vsel %vm627, %v622, %v610
    %v638 = vsel %vm627, %v624, %v612
    %v639 = vsel %vm627, %v626, %v614
    %s640 = scalar_lea.vmem [#allocation3], 576
    %v641 = vld [vmem:[%s640] sm:$0xff]
    %v642 = vld [vmem:[%s640 + $0x8] sm:$0xff]
    %v643 = vld [vmem:[%s640 + $0x10] sm:$0xff]
    %v644 = vld [vmem:[%s640 + $0x18] sm:$0xff]
    %v645 = vld [vmem:[%s640 + $0x20] sm:$0xff]
    %v646 = vld [vmem:[%s640 + $0x28] sm:$0xff]
    %v647 = vld [vmem:[%s640 + $0x30] sm:$0xff]
    %v648 = vld [vmem:[%s640 + $0x38] sm:$0xff]
    %v649 = vld [vmem:[%s640 + $0x40] sm:$0xff]
    %v650 = vld [vmem:[%s640 + $0x48] sm:$0xff]
    %v651 = vld [vmem:[%s640 + $0x50] sm:$0xff]
    %v652 = vld [vmem:[%s640 + $0x58] sm:$0xff]
    %v653 = vmul.f32 %v641, %v628
    %v654 = vmul.f32 %v642, %v634
    %v655 = vmul.f32 %v643, %v629
    %v656 = vmul.f32 %v644, %v635
    %v657 = vmul.f32 %v645, %v630
    %v658 = vmul.f32 %v646, %v636
    %v659 = vmul.f32 %v647, %v631
    %v660 = vmul.f32 %v648, %v637
    %v661 = vmul.f32 %v649, %v632
    %v662 = vmul.f32 %v650, %v638
    %v663 = vmul.f32 %v651, %v633
    %v664 = vmul.f32 %v652, %v639
    %v665 = vadd.f32 %v591, %v653
    %v666 = vadd.f32 %v592, %v654
    %v667 = vadd.f32 %v593, %v655
    %v668 = vadd.f32 %v594, %v656
    %v669 = vadd.f32 %v595, %v657
    %v670 = vadd.f32 %v596, %v658
    %v671 = vadd.f32 %v597, %v659
    %v672 = vadd.f32 %v598, %v660
    %v673 = vadd.f32 %v599, %v661
    %v674 = vadd.f32 %v600, %v662
    %v675 = vadd.f32 %v601, %v663
    %v676 = vadd.f32 %v602, %v664
    %677 = vrot.lane.b32.xlu0 %v195, 112
    %v678 = vpop.permute.xlu0 %677
    %679 = vrot.lane.b32.xlu0 %v197, 112
    %v680 = vpop.permute.xlu0 %679
    %681 = vrot.lane.b32.xlu0 %v199, 112
    %v682 = vpop.permute.xlu0 %681
    %683 = vrot.lane.b32.xlu0 %v201, 112
    %v684 = vpop.permute.xlu0 %683
    %685 = vrot.lane.b32.xlu0 %v203, 112
    %v686 = vpop.permute.xlu0 %685
    %687 = vrot.lane.b32.xlu0 %v205, 112
    %v688 = vpop.permute.xlu0 %687
    %689 = vrot.lane.b32.xlu0 %v196, 112
    %v690 = vpop.permute.xlu0 %689
    %691 = vrot.lane.b32.xlu0 %v198, 112
    %v692 = vpop.permute.xlu0 %691
    %693 = vrot.lane.b32.xlu0 %v200, 112
    %v694 = vpop.permute.xlu0 %693
    %695 = vrot.lane.b32.xlu0 %v202, 112
    %v696 = vpop.permute.xlu0 %695
    %697 = vrot.lane.b32.xlu0 %v204, 112
    %v698 = vpop.permute.xlu0 %697
    %699 = vrot.lane.b32.xlu0 %v206, 112
    %v700 = vpop.permute.xlu0 %699
    %vm701 = vcmp.lt.s32.totalorder %v257, 112
    %v702 = vsel %vm701, %v678, %v690
    %v703 = vsel %vm701, %v680, %v692
    %v704 = vsel %vm701, %v682, %v694
    %v705 = vsel %vm701, %v684, %v696
    %v706 = vsel %vm701, %v686, %v698
    %v707 = vsel %vm701, %v688, %v700
    %v708 = vsel %vm701, %v690, %v678
    %v709 = vsel %vm701, %v692, %v680
    %v710 = vsel %vm701, %v694, %v682
    %v711 = vsel %vm701, %v696, %v684
    %v712 = vsel %vm701, %v698, %v686
    %v713 = vsel %vm701, %v700, %v688
    %s714 = scalar_lea.vmem [#allocation3], 672
    %v715 = vld [vmem:[%s714] sm:$0xff]
    %v716 = vld [vmem:[%s714 + $0x8] sm:$0xff]
    %v717 = vld [vmem:[%s714 + $0x10] sm:$0xff]
    %v718 = vld [vmem:[%s714 + $0x18] sm:$0xff]
    %v719 = vld [vmem:[%s714 + $0x20] sm:$0xff]
    %v720 = vld [vmem:[%s714 + $0x28] sm:$0xff]
    %v721 = vld [vmem:[%s714 + $0x30] sm:$0xff]
    %v722 = vld [vmem:[%s714 + $0x38] sm:$0xff]
    %v723 = vld [vmem:[%s714 + $0x40] sm:$0xff]
    %v724 = vld [vmem:[%s714 + $0x48] sm:$0xff]
    %v725 = vld [vmem:[%s714 + $0x50] sm:$0xff]
    %v726 = vld [vmem:[%s714 + $0x58] sm:$0xff]
    %v727 = vmul.f32 %v715, %v702
    %v728 = vmul.f32 %v716, %v708
    %v729 = vmul.f32 %v717, %v703
    %v730 = vmul.f32 %v718, %v709
    %v731 = vmul.f32 %v719, %v704
    %v732 = vmul.f32 %v720, %v710
    %v733 = vmul.f32 %v721, %v705
    %v734 = vmul.f32 %v722, %v711
    %v735 = vmul.f32 %v723, %v706
    %v736 = vmul.f32 %v724, %v712
    %v737 = vmul.f32 %v725, %v707
    %v738 = vmul.f32 %v726, %v713
    %v739 = vadd.f32 %v665, %v727
    %v740 = vadd.f32 %v666, %v728
    %v741 = vadd.f32 %v667, %v729
    %v742 = vadd.f32 %v668, %v730
    %v743 = vadd.f32 %v669, %v731
    %v744 = vadd.f32 %v670, %v732
    %v745 = vadd.f32 %v671, %v733
    %v746 = vadd.f32 %v672, %v734
    %v747 = vadd.f32 %v673, %v735
    %v748 = vadd.f32 %v674, %v736
    %v749 = vadd.f32 %v675, %v737
    %v750 = vadd.f32 %v676, %v738
    %751 = vrot.lane.b32.xlu0 %v195, 111
    %v752 = vpop.permute.xlu0 %751
    %753 = vrot.lane.b32.xlu0 %v197, 111
    %v754 = vpop.permute.xlu0 %753
    %755 = vrot.lane.b32.xlu0 %v199, 111
    %v756 = vpop.permute.xlu0 %755
    %757 = vrot.lane.b32.xlu0 %v201, 111
    %v758 = vpop.permute.xlu0 %757
    %759 = vrot.lane.b32.xlu0 %v203, 111
    %v760 = vpop.permute.xlu0 %759
    %761 = vrot.lane.b32.xlu0 %v205, 111
    %v762 = vpop.permute.xlu0 %761
    %763 = vrot.lane.b32.xlu0 %v196, 111
    %v764 = vpop.permute.xlu0 %763
    %765 = vrot.lane.b32.xlu0 %v198, 111
    %v766 = vpop.permute.xlu0 %765
    %767 = vrot.lane.b32.xlu0 %v200, 111
    %v768 = vpop.permute.xlu0 %767
    %769 = vrot.lane.b32.xlu0 %v202, 111
    %v770 = vpop.permute.xlu0 %769
    %771 = vrot.lane.b32.xlu0 %v204, 111
    %v772 = vpop.permute.xlu0 %771
    %773 = vrot.lane.b32.xlu0 %v206, 111
    %v774 = vpop.permute.xlu0 %773
    %vm775 = vcmp.lt.s32.totalorder %v257, 111
    %v776 = vsel %vm775, %v752, %v764
    %v777 = vsel %vm775, %v754, %v766
    %v778 = vsel %vm775, %v756, %v768
    %v779 = vsel %vm775, %v758, %v770
    %v780 = vsel %vm775, %v760, %v772
    %v781 = vsel %vm775, %v762, %v774
    %v782 = vsel %vm775, %v764, %v752
    %v783 = vsel %vm775, %v766, %v754
    %v784 = vsel %vm775, %v768, %v756
    %v785 = vsel %vm775, %v770, %v758
    %v786 = vsel %vm775, %v772, %v760
    %v787 = vsel %vm775, %v774, %v762
    %s788 = scalar_lea.vmem [#allocation3], 768
    %v789 = vld [vmem:[%s788] sm:$0xff]
    %v790 = vld [vmem:[%s788 + $0x8] sm:$0xff]
    %v791 = vld [vmem:[%s788 + $0x10] sm:$0xff]
    %v792 = vld [vmem:[%s788 + $0x18] sm:$0xff]
    %v793 = vld [vmem:[%s788 + $0x20] sm:$0xff]
    %v794 = vld [vmem:[%s788 + $0x28] sm:$0xff]
    %v795 = vld [vmem:[%s788 + $0x30] sm:$0xff]
    %v796 = vld [vmem:[%s788 + $0x38] sm:$0xff]
    %v797 = vld [vmem:[%s788 + $0x40] sm:$0xff]
    %v798 = vld [vmem:[%s788 + $0x48] sm:$0xff]
    %v799 = vld [vmem:[%s788 + $0x50] sm:$0xff]
    %v800 = vld [vmem:[%s788 + $0x58] sm:$0xff]
    %v801 = vmul.f32 %v789, %v776
    %v802 = vmul.f32 %v790, %v782
    %v803 = vmul.f32 %v791, %v777
    %v804 = vmul.f32 %v792, %v783
    %v805 = vmul.f32 %v793, %v778
    %v806 = vmul.f32 %v794, %v784
    %v807 = vmul.f32 %v795, %v779
    %v808 = vmul.f32 %v796, %v785
    %v809 = vmul.f32 %v797, %v780
    %v810 = vmul.f32 %v798, %v786
    %v811 = vmul.f32 %v799, %v781
    %v812 = vmul.f32 %v800, %v787
    %v813 = vadd.f32 %v739, %v801
    %v814 = vadd.f32 %v740, %v802
    %v815 = vadd.f32 %v741, %v803
    %v816 = vadd.f32 %v742, %v804
    %v817 = vadd.f32 %v743, %v805
    %v818 = vadd.f32 %v744, %v806
    %v819 = vadd.f32 %v745, %v807
    %v820 = vadd.f32 %v746, %v808
    %v821 = vadd.f32 %v747, %v809
    %v822 = vadd.f32 %v748, %v810
    %v823 = vadd.f32 %v749, %v811
    %v824 = vadd.f32 %v750, %v812
    %v825 = vld [vmem:[%s4] sm:$0xff]
    %v826 = vld [vmem:[%s4 + $0x8] sm:$0xff]
    %v827 = vld [vmem:[%s4 + $0x10] sm:$0xff]
    %v828 = vld [vmem:[%s4 + $0x18] sm:$0xff]
    %v829 = vld [vmem:[%s4 + $0x20] sm:$0xff]
    %v830 = vld [vmem:[%s4 + $0x28] sm:$0xff]
    %832 = vset.pattern.permute.xlu0 0
    %833 = vperm.xlu0 %832, %v825
    %v834 = vpop.permute.xlu0 %833
    %837 = vset.pattern.permute.xlu0 0
    %838 = vperm.xlu0 %837, %v826
    %v839 = vpop.permute.xlu0 %838
    %842 = vset.pattern.permute.xlu0 0
    %843 = vperm.xlu0 %842, %v827
    %v844 = vpop.permute.xlu0 %843
    %847 = vset.pattern.permute.xlu0 0
    %848 = vperm.xlu0 %847, %v828
    %v849 = vpop.permute.xlu0 %848
    %852 = vset.pattern.permute.xlu0 0
    %853 = vperm.xlu0 %852, %v829
    %v854 = vpop.permute.xlu0 %853
    %857 = vset.pattern.permute.xlu0 0
    %858 = vperm.xlu0 %857, %v830
    %v859 = vpop.permute.xlu0 %858
    %v861 = vadd.f32 %v813, %v834
    %v862 = vadd.f32 %v814, %v834
    %v863 = vadd.f32 %v815, %v839
    %v864 = vadd.f32 %v816, %v839
    %v865 = vadd.f32 %v817, %v844
    %v866 = vadd.f32 %v818, %v844
    %v867 = vadd.f32 %v819, %v849
    %v868 = vadd.f32 %v820, %v849
    %v869 = vadd.f32 %v821, %v854
    %v870 = vadd.f32 %v822, %v854
    %v871 = vadd.f32 %v823, %v859
    %v872 = vadd.f32 %v824, %v859
    %v873 = vmax.f32 %v861, 0.0
    %v874 = vmax.f32 %v862, 0.0
    %v875 = vmax.f32 %v863, 0.0
    %v876 = vmax.f32 %v864, 0.0
    %v877 = vmax.f32 %v865, 0.0
    %v878 = vmax.f32 %v866, 0.0
    %v879 = vmax.f32 %v867, 0.0
    %v880 = vmax.f32 %v868, 0.0
    %v881 = vmax.f32 %v869, 0.0
    %v882 = vmax.f32 %v870, 0.0
    %v883 = vmax.f32 %v871, 0.0
    %v884 = vmax.f32 %v872, 0.0
    %v885 = vmin.f32 %v873, 6.0
    %v886 = vmin.f32 %v874, 6.0
    %v887 = vmin.f32 %v875, 6.0
    %v888 = vmin.f32 %v876, 6.0
    %v889 = vmin.f32 %v877, 6.0
    %v890 = vmin.f32 %v878, 6.0
    %v891 = vmin.f32 %v879, 6.0
    %v892 = vmin.f32 %v880, 6.0
    %v893 = vmin.f32 %v881, 6.0
    %v894 = vmin.f32 %v882, 6.0
    %v895 = vmin.f32 %v883, 6.0
    %v896 = vmin.f32 %v884, 6.0
    %v897 = vpack.c.bf16 %v887, %v885
    %v898 = vpack.c.bf16 %v888, %v886
    %v899 = vpack.c.bf16 %v891, %v889
    %v900 = vpack.c.bf16 %v892, %v890
    %v901 = vpack.c.bf16 %v895, %v893
    %v902 = vpack.c.bf16 %v896, %v894
    %903 = vst [vmem:[#allocation2] sm:$0xff] %v897
    %904 = vst [vmem:[#allocation2 + $0x8] sm:$0xff] %v898
    %905 = vst [vmem:[#allocation2 + $0x20] sm:$0xff] %v899
    %906 = vst [vmem:[#allocation2 + $0x28] sm:$0xff] %v900
    %907 = vst [vmem:[#allocation2 + $0x40] sm:$0xff] %v901
    %908 = vst [vmem:[#allocation2 + $0x48] sm:$0xff] %v902
    %v909 = vld [vmem:[%s0 + $0x10] sm:$0xff]
    %v910 = vld [vmem:[%s0 + $0x18] sm:$0xff]
    %v911 = vld [vmem:[%s1] sm:$0xf]
    %v912 = vld [vmem:[%s1 + $0x4] sm:$0xf]
    %v913 = vld [vmem:[%s1 + $0x8] sm:$0xf]
    %v914 = vld [vmem:[%s1 + $0xc] sm:$0xf]
    %v915 = vld [vmem:[%s1 + $0x10] sm:$0xf]
    %v916 = vld [vmem:[%s1 + $0x14] sm:$0xf]
    %v917 = vpack.c.bf16 %v909, %v909
    %v918 = vpack.c.bf16 %v910, %v910
    %v919 = vld [vmem:[%s2] sm:$0xff]
    %v920 = vld [vmem:[%s2 + $0x8] sm:$0xff]
    %v921 = vld [vmem:[%s2 + $0x10] sm:$0xff]
    %v922 = vld [vmem:[%s2 + $0x18] sm:$0xff]
    %v923 = vld [vmem:[%s2 + $0x20] sm:$0xff]
    %v924 = vld [vmem:[%s2 + $0x28] sm:$0xff]
    %926 = vset.pattern.permute.xlu0 0
    %927 = vperm.xlu0 %926, %v919
    %v928 = vpop.permute.xlu0 %927
    %931 = vset.pattern.permute.xlu0 0
    %932 = vperm.xlu0 %931, %v920
    %v933 = vpop.permute.xlu0 %932
    %936 = vset.pattern.permute.xlu0 0
    %937 = vperm.xlu0 %936, %v921
    %v938 = vpop.permute.xlu0 %937
    %941 = vset.pattern.permute.xlu0 0
    %942 = vperm.xlu0 %941, %v922
    %v943 = vpop.permute.xlu0 %942
    %946 = vset.pattern.permute.xlu0 0
    %947 = vperm.xlu0 %946, %v923
    %v948 = vpop.permute.xlu0 %947
    %951 = vset.pattern.permute.xlu0 0
    %952 = vperm.xlu0 %951, %v924
    %v953 = vpop.permute.xlu0 %952
    %v961 = vunpack.c.l.b16 %v911
    %v962 = vunpack.c.l.b16 %v912
    %v963 = vunpack.c.l.b16 %v913
    %v964 = vunpack.c.l.b16 %v914
    %v965 = vunpack.c.l.b16 %v915
    %v966 = vunpack.c.l.b16 %v916
    %v967 = vpack.c.b16 %v962, %v961
    %v968 = vpack.c.b16 %v964, %v963
    %v969 = vpack.c.b16 %v966, %v965
    %v971 = vsel %vm103, %v967, 0
    %v974 = vsel %vm103, %v968, 0
    %v977 = vsel %vm103, %v969, 0
    %v980 = vsel %vm113, %v917, 0
    %v983 = vsel %vm113, %v918, 0
    %985 = vmatprep.subr.bf16.mxu0 %v983
    %986 = vmatpush1.bf16.msra.mxu0 %v980
    %987 = vmatprep.subr.bf16.mxu0 0
    %988 = vmatpush1.bf16.msra.mxu0 0
    %989 = vmatprep.subr.bf16.mxu0 0
    %990 = vmatpush1.bf16.msra.mxu0 0
    %991 = vmatprep.subr.bf16.mxu0 0
    %992 = vmatpush1.bf16.msra.mxu0 0
    %993 = vmatprep.subr.bf16.mxu0 0
    %994 = vmatpush1.bf16.msra.mxu0 0
    %995 = vmatprep.subr.bf16.mxu0 0
    %996 = vmatpush1.bf16.msra.mxu0 0
    %997 = vmatprep.subr.bf16.mxu0 0
    %998 = vmatpush1.bf16.msra.mxu0 0
    %999 = vmatprep.subr.bf16.mxu0 0
    %1000 = vmatpush1.bf16.msra.mxu0 0
    %1001 = vmatprep.subr.bf16.mxu0 0
    %1002 = vmatpush1.bf16.msra.mxu0 0
    %1003 = vmatprep.subr.bf16.mxu0 0
    %1004 = vmatpush1.bf16.msra.mxu0 0
    %1005 = vmatprep.subr.bf16.mxu0 0
    %1006 = vmatpush1.bf16.msra.mxu0 0
    %1007 = vmatprep.subr.bf16.mxu0 0
    %1008 = vmatpush1.bf16.msra.mxu0 0
    %1009 = vmatprep.subr.bf16.mxu0 0
    %1010 = vmatpush1.bf16.msra.mxu0 0
    %1011 = vmatprep.subr.bf16.mxu0 0
    %1012 = vmatpush1.bf16.msra.mxu0 0
    %1013 = vmatprep.subr.bf16.mxu0 0
    %1014 = vmatpush1.bf16.msra.mxu0 0
    %1015 = vmatprep.subr.bf16.mxu0 0
    %1016 = vmatpush1.bf16.msra.mxu0 0
    %1017 = vmatprep.mubr.bf16.mxu0 0
    %1018 = vmatmul.mubr.bf16.gmra.mrb[0].mxu0 %v971
    %v1019 = vpop.f32.mrb[0].mxu0
    %v1020 = vadd.f32 %v928, %v1019
    %v1021 = vpop.f32.mrb[0].mxu0
    %v1022 = vadd.f32 %v928, %v1021
    %v1023 = vpop.f32.mrb[0].mxu0
    %v1024 = vadd.f32 %v933, %v1023
    %v1025 = vpop.f32.mrb[0].mxu0
    %v1026 = vadd.f32 %v933, %v1025
    %1027 = vmatprep.mubr.bf16.mxu0 0
    %1028 = vmatmul.mubr.bf16.gmra.mrb[0].mxu0 %v974
    %v1029 = vpop.f32.mrb[0].mxu0
    %v1030 = vadd.f32 %v938, %v1029
    %v1031 = vpop.f32.mrb[0].mxu0
    %v1032 = vadd.f32 %v938, %v1031
    %v1033 = vpop.f32.mrb[0].mxu0
    %v1034 = vadd.f32 %v943, %v1033
    %v1035 = vpop.f32.mrb[0].mxu0
    %v1036 = vadd.f32 %v943, %v1035
    %1037 = vmatprep.mubr.bf16.mxu0 0
    %1038 = vmatmul.mubr.bf16.gmra.mrb[0].mxu0 %v977
    %v1039 = vpop.f32.mrb[0].mxu0
    %v1040 = vadd.f32 %v948, %v1039
    %v1041 = vpop.f32.mrb[0].mxu0
    %v1042 = vadd.f32 %v948, %v1041
    %v1043 = vpop.f32.mrb[0].mxu0
    %v1044 = vadd.f32 %v953, %v1043
    %v1045 = vpop.f32.mrb[0].mxu0
    %v1046 = vadd.f32 %v953, %v1045
    %1047 = vdwg.mxu0
    %v1048 = vmax.f32 %v1020, 0.0
    %v1049 = vmax.f32 %v1022, 0.0
    %v1050 = vmax.f32 %v1024, 0.0
    %v1051 = vmax.f32 %v1026, 0.0
    %v1052 = vmax.f32 %v1030, 0.0
    %v1053 = vmax.f32 %v1032, 0.0
    %v1054 = vmax.f32 %v1034, 0.0
    %v1055 = vmax.f32 %v1036, 0.0
    %v1056 = vmax.f32 %v1040, 0.0
    %v1057 = vmax.f32 %v1042, 0.0
    %v1058 = vmax.f32 %v1044, 0.0
    %v1059 = vmax.f32 %v1046, 0.0
    %v1060 = vmin.f32 %v1048, 6.0
    %v1061 = vmin.f32 %v1049, 6.0
    %v1062 = vmin.f32 %v1050, 6.0
    %v1063 = vmin.f32 %v1051, 6.0
    %v1064 = vmin.f32 %v1052, 6.0
    %v1065 = vmin.f32 %v1053, 6.0
    %v1066 = vmin.f32 %v1054, 6.0
    %v1067 = vmin.f32 %v1055, 6.0
    %v1068 = vmin.f32 %v1056, 6.0
    %v1069 = vmin.f32 %v1057, 6.0
    %v1070 = vmin.f32 %v1058, 6.0
    %v1071 = vmin.f32 %v1059, 6.0
    %v1072 = vld [vmem:[%s207] sm:$0xff]
    %v1073 = vld [vmem:[%s207 + $0x8] sm:$0xff]
    %v1074 = vld [vmem:[%s207 + $0x10] sm:$0xff]
    %v1075 = vld [vmem:[%s207 + $0x18] sm:$0xff]
    %v1076 = vld [vmem:[%s207 + $0x20] sm:$0xff]
    %v1077 = vld [vmem:[%s207 + $0x28] sm:$0xff]
    %v1078 = vld [vmem:[%s207 + $0x30] sm:$0xff]
    %v1079 = vld [vmem:[%s207 + $0x38] sm:$0xff]
    %v1080 = vld [vmem:[%s207 + $0x40] sm:$0xff]
    %v1081 = vld [vmem:[%s207 + $0x48] sm:$0xff]
    %v1082 = vld [vmem:[%s207 + $0x50] sm:$0xff]
    %v1083 = vld [vmem:[%s207 + $0x58] sm:$0xff]
    %v1084 = vmul.f32 %v1072, %v1060
    %v1085 = vmul.f32 %v1073, %v1061
    %v1086 = vmul.f32 %v1074, %v1062
    %v1087 = vmul.f32 %v1075, %v1063
    %v1088 = vmul.f32 %v1076, %v1064
    %v1089 = vmul.f32 %v1077, %v1065
    %v1090 = vmul.f32 %v1078, %v1066
    %v1091 = vmul.f32 %v1079, %v1067
    %v1092 = vmul.f32 %v1080, %v1068
    %v1093 = vmul.f32 %v1081, %v1069
    %v1094 = vmul.f32 %v1082, %v1070
    %v1095 = vmul.f32 %v1083, %v1071
    %1096 = vrot.lane.b32.xlu0 %v1060, 17
    %v1097 = vpop.permute.xlu0 %1096
    %1098 = vrot.lane.b32.xlu0 %v1062, 17
    %v1099 = vpop.permute.xlu0 %1098
    %1100 = vrot.lane.b32.xlu0 %v1064, 17
    %v1101 = vpop.permute.xlu0 %1100
    %1102 = vrot.lane.b32.xlu0 %v1066, 17
    %v1103 = vpop.permute.xlu0 %1102
    %1104 = vrot.lane.b32.xlu0 %v1068, 17
    %v1105 = vpop.permute.xlu0 %1104
    %1106 = vrot.lane.b32.xlu0 %v1070, 17
    %v1107 = vpop.permute.xlu0 %1106
    %1108 = vrot.lane.b32.xlu0 %v1061, 17
    %v1109 = vpop.permute.xlu0 %1108
    %1110 = vrot.lane.b32.xlu0 %v1063, 17
    %v1111 = vpop.permute.xlu0 %1110
    %1112 = vrot.lane.b32.xlu0 %v1065, 17
    %v1113 = vpop.permute.xlu0 %1112
    %1114 = vrot.lane.b32.xlu0 %v1067, 17
    %v1115 = vpop.permute.xlu0 %1114
    %1116 = vrot.lane.b32.xlu0 %v1069, 17
    %v1117 = vpop.permute.xlu0 %1116
    %1118 = vrot.lane.b32.xlu0 %v1071, 17
    %v1119 = vpop.permute.xlu0 %1118
    %v1120 = vsel %vm258, %v1097, %v1109
    %v1121 = vsel %vm258, %v1099, %v1111
    %v1122 = vsel %vm258, %v1101, %v1113
    %v1123 = vsel %vm258, %v1103, %v1115
    %v1124 = vsel %vm258, %v1105, %v1117
    %v1125 = vsel %vm258, %v1107, %v1119
    %v1126 = vsel %vm258, %v1109, %v1097
    %v1127 = vsel %vm258, %v1111, %v1099
    %v1128 = vsel %vm258, %v1113, %v1101
    %v1129 = vsel %vm258, %v1115, %v1103
    %v1130 = vsel %vm258, %v1117, %v1105
    %v1131 = vsel %vm258, %v1119, %v1107
    %v1132 = vld [vmem:[#allocation3] sm:$0xff]
    %v1133 = vld [vmem:[#allocation3 + $0x8] sm:$0xff]
    %v1134 = vld [vmem:[#allocation3 + $0x10] sm:$0xff]
    %v1135 = vld [vmem:[#allocation3 + $0x18] sm:$0xff]
    %v1136 = vld [vmem:[#allocation3 + $0x20] sm:$0xff]
    %v1137 = vld [vmem:[#allocation3 + $0x28] sm:$0xff]
    %v1138 = vld [vmem:[#allocation3 + $0x30] sm:$0xff]
    %v1139 = vld [vmem:[#allocation3 + $0x38] sm:$0xff]
    %v1140 = vld [vmem:[#allocation3 + $0x40] sm:$0xff]
    %v1141 = vld [vmem:[#allocation3 + $0x48] sm:$0xff]
    %v1142 = vld [vmem:[#allocation3 + $0x50] sm:$0xff]
    %v1143 = vld [vmem:[#allocation3 + $0x58] sm:$0xff]
    %v1144 = vmul.f32 %v1132, %v1126
    %v1145 = vmul.f32 %v1133, %v1120
    %v1146 = vmul.f32 %v1134, %v1127
    %v1147 = vmul.f32 %v1135, %v1121
    %v1148 = vmul.f32 %v1136, %v1128
    %v1149 = vmul.f32 %v1137, %v1122
    %v1150 = vmul.f32 %v1138, %v1129
    %v1151 = vmul.f32 %v1139, %v1123
    %v1152 = vmul.f32 %v1140, %v1130
    %v1153 = vmul.f32 %v1141, %v1124
    %v1154 = vmul.f32 %v1142, %v1131
    %v1155 = vmul.f32 %v1143, %v1125
    %v1156 = vadd.f32 %v1084, %v1144
    %v1157 = vadd.f32 %v1085, %v1145
    %v1158 = vadd.f32 %v1086, %v1146
    %v1159 = vadd.f32 %v1087, %v1147
    %v1160 = vadd.f32 %v1088, %v1148
    %v1161 = vadd.f32 %v1089, %v1149
    %v1162 = vadd.f32 %v1090, %v1150
    %v1163 = vadd.f32 %v1091, %v1151
    %v1164 = vadd.f32 %v1092, %v1152
    %v1165 = vadd.f32 %v1093, %v1153
    %v1166 = vadd.f32 %v1094, %v1154
    %v1167 = vadd.f32 %v1095, %v1155
    %1168 = vrot.lane.b32.xlu0 %v1060, 16
    %v1169 = vpop.permute.xlu0 %1168
    %1170 = vrot.lane.b32.xlu0 %v1062, 16
    %v1171 = vpop.permute.xlu0 %1170
    %1172 = vrot.lane.b32.xlu0 %v1064, 16
    %v1173 = vpop.permute.xlu0 %1172
    %1174 = vrot.lane.b32.xlu0 %v1066, 16
    %v1175 = vpop.permute.xlu0 %1174
    %1176 = vrot.lane.b32.xlu0 %v1068, 16
    %v1177 = vpop.permute.xlu0 %1176
    %1178 = vrot.lane.b32.xlu0 %v1070, 16
    %v1179 = vpop.permute.xlu0 %1178
    %1180 = vrot.lane.b32.xlu0 %v1061, 16
    %v1181 = vpop.permute.xlu0 %1180
    %1182 = vrot.lane.b32.xlu0 %v1063, 16
    %v1183 = vpop.permute.xlu0 %1182
    %1184 = vrot.lane.b32.xlu0 %v1065, 16
    %v1185 = vpop.permute.xlu0 %1184
    %1186 = vrot.lane.b32.xlu0 %v1067, 16
    %v1187 = vpop.permute.xlu0 %1186
    %1188 = vrot.lane.b32.xlu0 %v1069, 16
    %v1189 = vpop.permute.xlu0 %1188
    %1190 = vrot.lane.b32.xlu0 %v1071, 16
    %v1191 = vpop.permute.xlu0 %1190
    %v1192 = vsel %vm331, %v1169, %v1181
    %v1193 = vsel %vm331, %v1171, %v1183
    %v1194 = vsel %vm331, %v1173, %v1185
    %v1195 = vsel %vm331, %v1175, %v1187
    %v1196 = vsel %vm331, %v1177, %v1189
    %v1197 = vsel %vm331, %v1179, %v1191
    %v1198 = vsel %vm331, %v1181, %v1169
    %v1199 = vsel %vm331, %v1183, %v1171
    %v1200 = vsel %vm331, %v1185, %v1173
    %v1201 = vsel %vm331, %v1187, %v1175
    %v1202 = vsel %vm331, %v1189, %v1177
    %v1203 = vsel %vm331, %v1191, %v1179
    %v1204 = vld [vmem:[%s344] sm:$0xff]
    %v1205 = vld [vmem:[%s344 + $0x8] sm:$0xff]
    %v1206 = vld [vmem:[%s344 + $0x10] sm:$0xff]
    %v1207 = vld [vmem:[%s344 + $0x18] sm:$0xff]
    %v1208 = vld [vmem:[%s344 + $0x20] sm:$0xff]
    %v1209 = vld [vmem:[%s344 + $0x28] sm:$0xff]
    %v1210 = vld [vmem:[%s344 + $0x30] sm:$0xff]
    %v1211 = vld [vmem:[%s344 + $0x38] sm:$0xff]
    %v1212 = vld [vmem:[%s344 + $0x40] sm:$0xff]
    %v1213 = vld [vmem:[%s344 + $0x48] sm:$0xff]
    %v1214 = vld [vmem:[%s344 + $0x50] sm:$0xff]
    %v1215 = vld [vmem:[%s344 + $0x58] sm:$0xff]
    %v1216 = vmul.f32 %v1204, %v1198
    %v1217 = vmul.f32 %v1205, %v1192
    %v1218 = vmul.f32 %v1206, %v1199
    %v1219 = vmul.f32 %v1207, %v1193
    %v1220 = vmul.f32 %v1208, %v1200
    %v1221 = vmul.f32 %v1209, %v1194
    %v1222 = vmul.f32 %v1210, %v1201
    %v1223 = vmul.f32 %v1211, %v1195
    %v1224 = vmul.f32 %v1212, %v1202
    %v1225 = vmul.f32 %v1213, %v1196
    %v1226 = vmul.f32 %v1214, %v1203
    %v1227 = vmul.f32 %v1215, %v1197
    %v1228 = vadd.f32 %v1156, %v1216
    %v1229 = vadd.f32 %v1157, %v1217
    %v1230 = vadd.f32 %v1158, %v1218
    %v1231 = vadd.f32 %v1159, %v1219
    %v1232 = vadd.f32 %v1160, %v1220
    %v1233 = vadd.f32 %v1161, %v1221
    %v1234 = vadd.f32 %v1162, %v1222
    %v1235 = vadd.f32 %v1163, %v1223
    %v1236 = vadd.f32 %v1164, %v1224
    %v1237 = vadd.f32 %v1165, %v1225
    %v1238 = vadd.f32 %v1166, %v1226
    %v1239 = vadd.f32 %v1167, %v1227
    %1240 = vrot.lane.b32.xlu0 %v1060, 15
    %v1241 = vpop.permute.xlu0 %1240
    %1242 = vrot.lane.b32.xlu0 %v1062, 15
    %v1243 = vpop.permute.xlu0 %1242
    %1244 = vrot.lane.b32.xlu0 %v1064, 15
    %v1245 = vpop.permute.xlu0 %1244
    %1246 = vrot.lane.b32.xlu0 %v1066, 15
    %v1247 = vpop.permute.xlu0 %1246
    %1248 = vrot.lane.b32.xlu0 %v1068, 15
    %v1249 = vpop.permute.xlu0 %1248
    %1250 = vrot.lane.b32.xlu0 %v1070, 15
    %v1251 = vpop.permute.xlu0 %1250
    %1252 = vrot.lane.b32.xlu0 %v1061, 15
    %v1253 = vpop.permute.xlu0 %1252
    %1254 = vrot.lane.b32.xlu0 %v1063, 15
    %v1255 = vpop.permute.xlu0 %1254
    %1256 = vrot.lane.b32.xlu0 %v1065, 15
    %v1257 = vpop.permute.xlu0 %1256
    %1258 = vrot.lane.b32.xlu0 %v1067, 15
    %v1259 = vpop.permute.xlu0 %1258
    %1260 = vrot.lane.b32.xlu0 %v1069, 15
    %v1261 = vpop.permute.xlu0 %1260
    %1262 = vrot.lane.b32.xlu0 %v1071, 15
    %v1263 = vpop.permute.xlu0 %1262
    %v1264 = vsel %vm405, %v1241, %v1253
    %v1265 = vsel %vm405, %v1243, %v1255
    %v1266 = vsel %vm405, %v1245, %v1257
    %v1267 = vsel %vm405, %v1247, %v1259
    %v1268 = vsel %vm405, %v1249, %v1261
    %v1269 = vsel %vm405, %v1251, %v1263
    %v1270 = vsel %vm405, %v1253, %v1241
    %v1271 = vsel %vm405, %v1255, %v1243
    %v1272 = vsel %vm405, %v1257, %v1245
    %v1273 = vsel %vm405, %v1259, %v1247
    %v1274 = vsel %vm405, %v1261, %v1249
    %v1275 = vsel %vm405, %v1263, %v1251
    %v1276 = vld [vmem:[%s418] sm:$0xff]
    %v1277 = vld [vmem:[%s418 + $0x8] sm:$0xff]
    %v1278 = vld [vmem:[%s418 + $0x10] sm:$0xff]
    %v1279 = vld [vmem:[%s418 + $0x18] sm:$0xff]
    %v1280 = vld [vmem:[%s418 + $0x20] sm:$0xff]
    %v1281 = vld [vmem:[%s418 + $0x28] sm:$0xff]
    %v1282 = vld [vmem:[%s418 + $0x30] sm:$0xff]
    %v1283 = vld [vmem:[%s418 + $0x38] sm:$0xff]
    %v1284 = vld [vmem:[%s418 + $0x40] sm:$0xff]
    %v1285 = vld [vmem:[%s418 + $0x48] sm:$0xff]
    %v1286 = vld [vmem:[%s418 + $0x50] sm:$0xff]
    %v1287 = vld [vmem:[%s418 + $0x58] sm:$0xff]
    %v1288 = vmul.f32 %v1276, %v1270
    %v1289 = vmul.f32 %v1277, %v1264
    %v1290 = vmul.f32 %v1278, %v1271
    %v1291 = vmul.f32 %v1279, %v1265
    %v1292 = vmul.f32 %v1280, %v1272
    %v1293 = vmul.f32 %v1281, %v1266
    %v1294 = vmul.f32 %v1282, %v1273
    %v1295 = vmul.f32 %v1283, %v1267
    %v1296 = vmul.f32 %v1284, %v1274
    %v1297 = vmul.f32 %v1285, %v1268
    %v1298 = vmul.f32 %v1286, %v1275
    %v1299 = vmul.f32 %v1287, %v1269
    %v1300 = vadd.f32 %v1228, %v1288
    %v1301 = vadd.f32 %v1229, %v1289
    %v1302 = vadd.f32 %v1230, %v1290
    %v1303 = vadd.f32 %v1231, %v1291
    %v1304 = vadd.f32 %v1232, %v1292
    %v1305 = vadd.f32 %v1233, %v1293
    %v1306 = vadd.f32 %v1234, %v1294
    %v1307 = vadd.f32 %v1235, %v1295
    %v1308 = vadd.f32 %v1236, %v1296
    %v1309 = vadd.f32 %v1237, %v1297
    %v1310 = vadd.f32 %v1238, %v1298
    %v1311 = vadd.f32 %v1239, %v1299
    %1312 = vrot.lane.b32.xlu0 %v1060, 1
    %v1313 = vpop.permute.xlu0 %1312
    %1314 = vrot.lane.b32.xlu0 %v1062, 1
    %v1315 = vpop.permute.xlu0 %1314
    %1316 = vrot.lane.b32.xlu0 %v1064, 1
    %v1317 = vpop.permute.xlu0 %1316
    %1318 = vrot.lane.b32.xlu0 %v1066, 1
    %v1319 = vpop.permute.xlu0 %1318
    %1320 = vrot.lane.b32.xlu0 %v1068, 1
    %v1321 = vpop.permute.xlu0 %1320
    %1322 = vrot.lane.b32.xlu0 %v1070, 1
    %v1323 = vpop.permute.xlu0 %1322
    %1324 = vrot.lane.b32.xlu0 %v1061, 1
    %v1325 = vpop.permute.xlu0 %1324
    %1326 = vrot.lane.b32.xlu0 %v1063, 1
    %v1327 = vpop.permute.xlu0 %1326
    %1328 = vrot.lane.b32.xlu0 %v1065, 1
    %v1329 = vpop.permute.xlu0 %1328
    %1330 = vrot.lane.b32.xlu0 %v1067, 1
    %v1331 = vpop.permute.xlu0 %1330
    %1332 = vrot.lane.b32.xlu0 %v1069, 1
    %v1333 = vpop.permute.xlu0 %1332
    %1334 = vrot.lane.b32.xlu0 %v1071, 1
    %v1335 = vpop.permute.xlu0 %1334
    %v1336 = vsel %vm479, %v1313, %v1325
    %v1337 = vsel %vm479, %v1315, %v1327
    %v1338 = vsel %vm479, %v1317, %v1329
    %v1339 = vsel %vm479, %v1319, %v1331
    %v1340 = vsel %vm479, %v1321, %v1333
    %v1341 = vsel %vm479, %v1323, %v1335
    %v1342 = vsel %vm479, %v1325, %v1313
    %v1343 = vsel %vm479, %v1327, %v1315
    %v1344 = vsel %vm479, %v1329, %v1317
    %v1345 = vsel %vm479, %v1331, %v1319
    %v1346 = vsel %vm479, %v1333, %v1321
    %v1347 = vsel %vm479, %v1335, %v1323
    %v1348 = vld [vmem:[%s492] sm:$0xff]
    %v1349 = vld [vmem:[%s492 + $0x8] sm:$0xff]
    %v1350 = vld [vmem:[%s492 + $0x10] sm:$0xff]
    %v1351 = vld [vmem:[%s492 + $0x18] sm:$0xff]
    %v1352 = vld [vmem:[%s492 + $0x20] sm:$0xff]
    %v1353 = vld [vmem:[%s492 + $0x28] sm:$0xff]
    %v1354 = vld [vmem:[%s492 + $0x30] sm:$0xff]
    %v1355 = vld [vmem:[%s492 + $0x38] sm:$0xff]
    %v1356 = vld [vmem:[%s492 + $0x40] sm:$0xff]
    %v1357 = vld [vmem:[%s492 + $0x48] sm:$0xff]
    %v1358 = vld [vmem:[%s492 + $0x50] sm:$0xff]
    %v1359 = vld [vmem:[%s492 + $0x58] sm:$0xff]
    %v1360 = vmul.f32 %v1348, %v1342
    %v1361 = vmul.f32 %v1349, %v1336
    %v1362 = vmul.f32 %v1350, %v1343
    %v1363 = vmul.f32 %v1351, %v1337
    %v1364 = vmul.f32 %v1352, %v1344
    %v1365 = vmul.f32 %v1353, %v1338
    %v1366 = vmul.f32 %v1354, %v1345
    %v1367 = vmul.f32 %v1355, %v1339
    %v1368 = vmul.f32 %v1356, %v1346
    %v1369 = vmul.f32 %v1357, %v1340
    %v1370 = vmul.f32 %v1358, %v1347
    %v1371 = vmul.f32 %v1359, %v1341
    %v1372 = vadd.f32 %v1300, %v1360
    %v1373 = vadd.f32 %v1301, %v1361
    %v1374 = vadd.f32 %v1302, %v1362
    %v1375 = vadd.f32 %v1303, %v1363
    %v1376 = vadd.f32 %v1304, %v1364
    %v1377 = vadd.f32 %v1305, %v1365
    %v1378 = vadd.f32 %v1306, %v1366
    %v1379 = vadd.f32 %v1307, %v1367
    %v1380 = vadd.f32 %v1308, %v1368
    %v1381 = vadd.f32 %v1309, %v1369
    %v1382 = vadd.f32 %v1310, %v1370
    %v1383 = vadd.f32 %v1311, %v1371
    %1384 = vrot.lane.b32.xlu0 %v1060, 127
    %v1385 = vpop.permute.xlu0 %1384
    %1386 = vrot.lane.b32.xlu0 %v1062, 127
    %v1387 = vpop.permute.xlu0 %1386
    %1388 = vrot.lane.b32.xlu0 %v1064, 127
    %v1389 = vpop.permute.xlu0 %1388
    %1390 = vrot.lane.b32.xlu0 %v1066, 127
    %v1391 = vpop.permute.xlu0 %1390
    %1392 = vrot.lane.b32.xlu0 %v1068, 127
    %v1393 = vpop.permute.xlu0 %1392
    %1394 = vrot.lane.b32.xlu0 %v1070, 127
    %v1395 = vpop.permute.xlu0 %1394
    %1396 = vrot.lane.b32.xlu0 %v1061, 127
    %v1397 = vpop.permute.xlu0 %1396
    %1398 = vrot.lane.b32.xlu0 %v1063, 127
    %v1399 = vpop.permute.xlu0 %1398
    %1400 = vrot.lane.b32.xlu0 %v1065, 127
    %v1401 = vpop.permute.xlu0 %1400
    %1402 = vrot.lane.b32.xlu0 %v1067, 127
    %v1403 = vpop.permute.xlu0 %1402
    %1404 = vrot.lane.b32.xlu0 %v1069, 127
    %v1405 = vpop.permute.xlu0 %1404
    %1406 = vrot.lane.b32.xlu0 %v1071, 127
    %v1407 = vpop.permute.xlu0 %1406
    %v1408 = vsel %vm553, %v1385, %v1397
    %v1409 = vsel %vm553, %v1387, %v1399
    %v1410 = vsel %vm553, %v1389, %v1401
    %v1411 = vsel %vm553, %v1391, %v1403
    %v1412 = vsel %vm553, %v1393, %v1405
    %v1413 = vsel %vm553, %v1395, %v1407
    %v1414 = vsel %vm553, %v1397, %v1385
    %v1415 = vsel %vm553, %v1399, %v1387
    %v1416 = vsel %vm553, %v1401, %v1389
    %v1417 = vsel %vm553, %v1403, %v1391
    %v1418 = vsel %vm553, %v1405, %v1393
    %v1419 = vsel %vm553, %v1407, %v1395
    %v1420 = vld [vmem:[%s566] sm:$0xff]
    %v1421 = vld [vmem:[%s566 + $0x8] sm:$0xff]
    %v1422 = vld [vmem:[%s566 + $0x10] sm:$0xff]
    %v1423 = vld [vmem:[%s566 + $0x18] sm:$0xff]
    %v1424 = vld [vmem:[%s566 + $0x20] sm:$0xff]
    %v1425 = vld [vmem:[%s566 + $0x28] sm:$0xff]
    %v1426 = vld [vmem:[%s566 + $0x30] sm:$0xff]
    %v1427 = vld [vmem:[%s566 + $0x38] sm:$0xff]
    %v1428 = vld [vmem:[%s566 + $0x40] sm:$0xff]
    %v1429 = vld [vmem:[%s566 + $0x48] sm:$0xff]
    %v1430 = vld [vmem:[%s566 + $0x50] sm:$0xff]
    %v1431 = vld [vmem:[%s566 + $0x58] sm:$0xff]
    %v1432 = vmul.f32 %v1420, %v1408
    %v1433 = vmul.f32 %v1421, %v1414
    %v1434 = vmul.f32 %v1422, %v1409
    %v1435 = vmul.f32 %v1423, %v1415
    %v1436 = vmul.f32 %v1424, %v1410
    %v1437 = vmul.f32 %v1425, %v1416
    %v1438 = vmul.f32 %v1426, %v1411
    %v1439 = vmul.f32 %v1427, %v1417
    %v1440 = vmul.f32 %v1428, %v1412
    %v1441 = vmul.f32 %v1429, %v1418
    %v1442 = vmul.f32 %v1430, %v1413
    %v1443 = vmul.f32 %v1431, %v1419
    %v1444 = vadd.f32 %v1372, %v1432
    %v1445 = vadd.f32 %v1373, %v1433
    %v1446 = vadd.f32 %v1374, %v1434
    %v1447 = vadd.f32 %v1375, %v1435
    %v1448 = vadd.f32 %v1376, %v1436
    %v1449 = vadd.f32 %v1377, %v1437
    %v1450 = vadd.f32 %v1378, %v1438
    %v1451 = vadd.f32 %v1379, %v1439
    %v1452 = vadd.f32 %v1380, %v1440
    %v1453 = vadd.f32 %v1381, %v1441
    %v1454 = vadd.f32 %v1382, %v1442
    %v1455 = vadd.f32 %v1383, %v1443
    %1456 = vrot.lane.b32.xlu0 %v1060, 113
    %v1457 = vpop.permute.xlu0 %1456
    %1458 = vrot.lane.b32.xlu0 %v1062, 113
    %v1459 = vpop.permute.xlu0 %1458
    %1460 = vrot.lane.b32.xlu0 %v1064, 113
    %v1461 = vpop.permute.xlu0 %1460
    %1462 = vrot.lane.b32.xlu0 %v1066, 113
    %v1463 = vpop.permute.xlu0 %1462
    %1464 = vrot.lane.b32.xlu0 %v1068, 113
    %v1465 = vpop.permute.xlu0 %1464
    %1466 = vrot.lane.b32.xlu0 %v1070, 113
    %v1467 = vpop.permute.xlu0 %1466
    %1468 = vrot.lane.b32.xlu0 %v1061, 113
    %v1469 = vpop.permute.xlu0 %1468
    %1470 = vrot.lane.b32.xlu0 %v1063, 113
    %v1471 = vpop.permute.xlu0 %1470
    %1472 = vrot.lane.b32.xlu0 %v1065, 113
    %v1473 = vpop.permute.xlu0 %1472
    %1474 = vrot.lane.b32.xlu0 %v1067, 113
    %v1475 = vpop.permute.xlu0 %1474
    %1476 = vrot.lane.b32.xlu0 %v1069, 113
    %v1477 = vpop.permute.xlu0 %1476
    %1478 = vrot.lane.b32.xlu0 %v1071, 113
    %v1479 = vpop.permute.xlu0 %1478
    %v1480 = vsel %vm627, %v1457, %v1469
    %v1481 = vsel %vm627, %v1459, %v1471
    %v1482 = vsel %vm627, %v1461, %v1473
    %v1483 = vsel %vm627, %v1463, %v1475
    %v1484 = vsel %vm627, %v1465, %v1477
    %v1485 = vsel %vm627, %v1467, %v1479
    %v1486 = vsel %vm627, %v1469, %v1457
    %v1487 = vsel %vm627, %v1471, %v1459
    %v1488 = vsel %vm627, %v1473, %v1461
    %v1489 = vsel %vm627, %v1475, %v1463
    %v1490 = vsel %vm627, %v1477, %v1465
    %v1491 = vsel %vm627, %v1479, %v1467
    %v1492 = vld [vmem:[%s640] sm:$0xff]
    %v1493 = vld [vmem:[%s640 + $0x8] sm:$0xff]
    %v1494 = vld [vmem:[%s640 + $0x10] sm:$0xff]
    %v1495 = vld [vmem:[%s640 + $0x18] sm:$0xff]
    %v1496 = vld [vmem:[%s640 + $0x20] sm:$0xff]
    %v1497 = vld [vmem:[%s640 + $0x28] sm:$0xff]
    %v1498 = vld [vmem:[%s640 + $0x30] sm:$0xff]
    %v1499 = vld [vmem:[%s640 + $0x38] sm:$0xff]
    %v1500 = vld [vmem:[%s640 + $0x40] sm:$0xff]
    %v1501 = vld [vmem:[%s640 + $0x48] sm:$0xff]
    %v1502 = vld [vmem:[%s640 + $0x50] sm:$0xff]
    %v1503 = vld [vmem:[%s640 + $0x58] sm:$0xff]
    %v1504 = vmul.f32 %v1492, %v1480
    %v1505 = vmul.f32 %v1493, %v1486
    %v1506 = vmul.f32 %v1494, %v1481
    %v1507 = vmul.f32 %v1495, %v1487
    %v1508 = vmul.f32 %v1496, %v1482
    %v1509 = vmul.f32 %v1497, %v1488
    %v1510 = vmul.f32 %v1498, %v1483
    %v1511 = vmul.f32 %v1499, %v1489
    %v1512 = vmul.f32 %v1500, %v1484
    %v1513 = vmul.f32 %v1501, %v1490
    %v1514 = vmul.f32 %v1502, %v1485
    %v1515 = vmul.f32 %v1503, %v1491
    %v1516 = vadd.f32 %v1444, %v1504
    %v1517 = vadd.f32 %v1445, %v1505
    %v1518 = vadd.f32 %v1446, %v1506
    %v1519 = vadd.f32 %v1447, %v1507
    %v1520 = vadd.f32 %v1448, %v1508
    %v1521 = vadd.f32 %v1449, %v1509
    %v1522 = vadd.f32 %v1450, %v1510
    %v1523 = vadd.f32 %v1451, %v1511
    %v1524 = vadd.f32 %v1452, %v1512
    %v1525 = vadd.f32 %v1453, %v1513
    %v1526 = vadd.f32 %v1454, %v1514
    %v1527 = vadd.f32 %v1455, %v1515
    %1528 = vrot.lane.b32.xlu0 %v1060, 112
    %v1529 = vpop.permute.xlu0 %1528
    %1530 = vrot.lane.b32.xlu0 %v1062, 112
    %v1531 = vpop.permute.xlu0 %1530
    %1532 = vrot.lane.b32.xlu0 %v1064, 112
    %v1533 = vpop.permute.xlu0 %1532
    %1534 = vrot.lane.b32.xlu0 %v1066, 112
    %v1535 = vpop.permute.xlu0 %1534
    %1536 = vrot.lane.b32.xlu0 %v1068, 112
    %v1537 = vpop.permute.xlu0 %1536
    %1538 = vrot.lane.b32.xlu0 %v1070, 112
    %v1539 = vpop.permute.xlu0 %1538
    %1540 = vrot.lane.b32.xlu0 %v1061, 112
    %v1541 = vpop.permute.xlu0 %1540
    %1542 = vrot.lane.b32.xlu0 %v1063, 112
    %v1543 = vpop.permute.xlu0 %1542
    %1544 = vrot.lane.b32.xlu0 %v1065, 112
    %v1545 = vpop.permute.xlu0 %1544
    %1546 = vrot.lane.b32.xlu0 %v1067, 112
    %v1547 = vpop.permute.xlu0 %1546
    %1548 = vrot.lane.b32.xlu0 %v1069, 112
    %v1549 = vpop.permute.xlu0 %1548
    %1550 = vrot.lane.b32.xlu0 %v1071, 112
    %v1551 = vpop.permute.xlu0 %1550
    %v1552 = vsel %vm701, %v1529, %v1541
    %v1553 = vsel %vm701, %v1531, %v1543
    %v1554 = vsel %vm701, %v1533, %v1545
    %v1555 = vsel %vm701, %v1535, %v1547
    %v1556 = vsel %vm701, %v1537, %v1549
    %v1557 = vsel %vm701, %v1539, %v1551
    %v1558 = vsel %vm701, %v1541, %v1529
    %v1559 = vsel %vm701, %v1543, %v1531
    %v1560 = vsel %vm701, %v1545, %v1533
    %v1561 = vsel %vm701, %v1547, %v1535
    %v1562 = vsel %vm701, %v1549, %v1537
    %v1563 = vsel %vm701, %v1551, %v1539
    %v1564 = vld [vmem:[%s714] sm:$0xff]
    %v1565 = vld [vmem:[%s714 + $0x8] sm:$0xff]
    %v1566 = vld [vmem:[%s714 + $0x10] sm:$0xff]
    %v1567 = vld [vmem:[%s714 + $0x18] sm:$0xff]
    %v1568 = vld [vmem:[%s714 + $0x20] sm:$0xff]
    %v1569 = vld [vmem:[%s714 + $0x28] sm:$0xff]
    %v1570 = vld [vmem:[%s714 + $0x30] sm:$0xff]
    %v1571 = vld [vmem:[%s714 + $0x38] sm:$0xff]
    %v1572 = vld [vmem:[%s714 + $0x40] sm:$0xff]
    %v1573 = vld [vmem:[%s714 + $0x48] sm:$0xff]
    %v1574 = vld [vmem:[%s714 + $0x50] sm:$0xff]
    %v1575 = vld [vmem:[%s714 + $0x58] sm:$0xff]
    %v1576 = vmul.f32 %v1564, %v1552
    %v1577 = vmul.f32 %v1565, %v1558
    %v1578 = vmul.f32 %v1566, %v1553
    %v1579 = vmul.f32 %v1567, %v1559
    %v1580 = vmul.f32 %v1568, %v1554
    %v1581 = vmul.f32 %v1569, %v1560
    %v1582 = vmul.f32 %v1570, %v1555
    %v1583 = vmul.f32 %v1571, %v1561
    %v1584 = vmul.f32 %v1572, %v1556
    %v1585 = vmul.f32 %v1573, %v1562
    %v1586 = vmul.f32 %v1574, %v1557
    %v1587 = vmul.f32 %v1575, %v1563
    %v1588 = vadd.f32 %v1516, %v1576
    %v1589 = vadd.f32 %v1517, %v1577
    %v1590 = vadd.f32 %v1518, %v1578
    %v1591 = vadd.f32 %v1519, %v1579
    %v1592 = vadd.f32 %v1520, %v1580
    %v1593 = vadd.f32 %v1521, %v1581
    %v1594 = vadd.f32 %v1522, %v1582
    %v1595 = vadd.f32 %v1523, %v1583
    %v1596 = vadd.f32 %v1524, %v1584
    %v1597 = vadd.f32 %v1525, %v1585
    %v1598 = vadd.f32 %v1526, %v1586
    %v1599 = vadd.f32 %v1527, %v1587
    %1600 = vrot.lane.b32.xlu0 %v1060, 111
    %v1601 = vpop.permute.xlu0 %1600
    %1602 = vrot.lane.b32.xlu0 %v1062, 111
    %v1603 = vpop.permute.xlu0 %1602
    %1604 = vrot.lane.b32.xlu0 %v1064, 111
    %v1605 = vpop.permute.xlu0 %1604
    %1606 = vrot.lane.b32.xlu0 %v1066, 111
    %v1607 = vpop.permute.xlu0 %1606
    %1608 = vrot.lane.b32.xlu0 %v1068, 111
    %v1609 = vpop.permute.xlu0 %1608
    %1610 = vrot.lane.b32.xlu0 %v1070, 111
    %v1611 = vpop.permute.xlu0 %1610
    %1612 = vrot.lane.b32.xlu0 %v1061, 111
    %v1613 = vpop.permute.xlu0 %1612
    %1614 = vrot.lane.b32.xlu0 %v1063, 111
    %v1615 = vpop.permute.xlu0 %1614
    %1616 = vrot.lane.b32.xlu0 %v1065, 111
    %v1617 = vpop.permute.xlu0 %1616
    %1618 = vrot.lane.b32.xlu0 %v1067, 111
    %v1619 = vpop.permute.xlu0 %1618
    %1620 = vrot.lane.b32.xlu0 %v1069, 111
    %v1621 = vpop.permute.xlu0 %1620
    %1622 = vrot.lane.b32.xlu0 %v1071, 111
    %v1623 = vpop.permute.xlu0 %1622
    %v1624 = vsel %vm775, %v1601, %v1613
    %v1625 = vsel %vm775, %v1603, %v1615
    %v1626 = vsel %vm775, %v1605, %v1617
    %v1627 = vsel %vm775, %v1607, %v1619
    %v1628 = vsel %vm775, %v1609, %v1621
    %v1629 = vsel %vm775, %v1611, %v1623
    %v1630 = vsel %vm775, %v1613, %v1601
    %v1631 = vsel %vm775, %v1615, %v1603
    %v1632 = vsel %vm775, %v1617, %v1605
    %v1633 = vsel %vm775, %v1619, %v1607
    %v1634 = vsel %vm775, %v1621, %v1609
    %v1635 = vsel %vm775, %v1623, %v1611
    %v1636 = vld [vmem:[%s788] sm:$0xff]
    %v1637 = vld [vmem:[%s788 + $0x8] sm:$0xff]
    %v1638 = vld [vmem:[%s788 + $0x10] sm:$0xff]
    %v1639 = vld [vmem:[%s788 + $0x18] sm:$0xff]
    %v1640 = vld [vmem:[%s788 + $0x20] sm:$0xff]
    %v1641 = vld [vmem:[%s788 + $0x28] sm:$0xff]
    %v1642 = vld [vmem:[%s788 + $0x30] sm:$0xff]
    %v1643 = vld [vmem:[%s788 + $0x38] sm:$0xff]
    %v1644 = vld [vmem:[%s788 + $0x40] sm:$0xff]
    %v1645 = vld [vmem:[%s788 + $0x48] sm:$0xff]
    %v1646 = vld [vmem:[%s788 + $0x50] sm:$0xff]
    %v1647 = vld [vmem:[%s788 + $0x58] sm:$0xff]
    %v1648 = vmul.f32 %v1636, %v1624
    %v1649 = vmul.f32 %v1637, %v1630
    %v1650 = vmul.f32 %v1638, %v1625
    %v1651 = vmul.f32 %v1639, %v1631
    %v1652 = vmul.f32 %v1640, %v1626
    %v1653 = vmul.f32 %v1641, %v1632
    %v1654 = vmul.f32 %v1642, %v1627
    %v1655 = vmul.f32 %v1643, %v1633
    %v1656 = vmul.f32 %v1644, %v1628
    %v1657 = vmul.f32 %v1645, %v1634
    %v1658 = vmul.f32 %v1646, %v1629
    %v1659 = vmul.f32 %v1647, %v1635
    %v1660 = vadd.f32 %v1588, %v1648
    %v1661 = vadd.f32 %v1589, %v1649
    %v1662 = vadd.f32 %v1590, %v1650
    %v1663 = vadd.f32 %v1591, %v1651
    %v1664 = vadd.f32 %v1592, %v1652
    %v1665 = vadd.f32 %v1593, %v1653
    %v1666 = vadd.f32 %v1594, %v1654
    %v1667 = vadd.f32 %v1595, %v1655
    %v1668 = vadd.f32 %v1596, %v1656
    %v1669 = vadd.f32 %v1597, %v1657
    %v1670 = vadd.f32 %v1598, %v1658
    %v1671 = vadd.f32 %v1599, %v1659
    %v1672 = vld [vmem:[%s4] sm:$0xff]
    %v1673 = vld [vmem:[%s4 + $0x8] sm:$0xff]
    %v1674 = vld [vmem:[%s4 + $0x10] sm:$0xff]
    %v1675 = vld [vmem:[%s4 + $0x18] sm:$0xff]
    %v1676 = vld [vmem:[%s4 + $0x20] sm:$0xff]
    %v1677 = vld [vmem:[%s4 + $0x28] sm:$0xff]
    %1679 = vset.pattern.permute.xlu0 0
    %1680 = vperm.xlu0 %1679, %v1672
    %v1681 = vpop.permute.xlu0 %1680
    %1684 = vset.pattern.permute.xlu0 0
    %1685 = vperm.xlu0 %1684, %v1673
    %v1686 = vpop.permute.xlu0 %1685
    %1689 = vset.pattern.permute.xlu0 0
    %1690 = vperm.xlu0 %1689, %v1674
    %v1691 = vpop.permute.xlu0 %1690
    %1694 = vset.pattern.permute.xlu0 0
    %1695 = vperm.xlu0 %1694, %v1675
    %v1696 = vpop.permute.xlu0 %1695
    %1699 = vset.pattern.permute.xlu0 0
    %1700 = vperm.xlu0 %1699, %v1676
    %v1701 = vpop.permute.xlu0 %1700
    %1704 = vset.pattern.permute.xlu0 0
    %1705 = vperm.xlu0 %1704, %v1677
    %v1706 = vpop.permute.xlu0 %1705
    %v1708 = vadd.f32 %v1660, %v1681
    %v1709 = vadd.f32 %v1661, %v1681
    %v1710 = vadd.f32 %v1662, %v1686
    %v1711 = vadd.f32 %v1663, %v1686
    %v1712 = vadd.f32 %v1664, %v1691
    %v1713 = vadd.f32 %v1665, %v1691
    %v1714 = vadd.f32 %v1666, %v1696
    %v1715 = vadd.f32 %v1667, %v1696
    %v1716 = vadd.f32 %v1668, %v1701
    %v1717 = vadd.f32 %v1669, %v1701
    %v1718 = vadd.f32 %v1670, %v1706
    %v1719 = vadd.f32 %v1671, %v1706
    %v1720 = vmax.f32 %v1708, 0.0
    %v1721 = vmax.f32 %v1709, 0.0
    %v1722 = vmax.f32 %v1710, 0.0
    %v1723 = vmax.f32 %v1711, 0.0
    %v1724 = vmax.f32 %v1712, 0.0
    %v1725 = vmax.f32 %v1713, 0.0
    %v1726 = vmax.f32 %v1714, 0.0
    %v1727 = vmax.f32 %v1715, 0.0
    %v1728 = vmax.f32 %v1716, 0.0
    %v1729 = vmax.f32 %v1717, 0.0
    %v1730 = vmax.f32 %v1718, 0.0
    %v1731 = vmax.f32 %v1719, 0.0
    %v1732 = vmin.f32 %v1720, 6.0
    %v1733 = vmin.f32 %v1721, 6.0
    %v1734 = vmin.f32 %v1722, 6.0
    %v1735 = vmin.f32 %v1723, 6.0
    %v1736 = vmin.f32 %v1724, 6.0
    %v1737 = vmin.f32 %v1725, 6.0
    %v1738 = vmin.f32 %v1726, 6.0
    %v1739 = vmin.f32 %v1727, 6.0
    %v1740 = vmin.f32 %v1728, 6.0
    %v1741 = vmin.f32 %v1729, 6.0
    %v1742 = vmin.f32 %v1730, 6.0
    %v1743 = vmin.f32 %v1731, 6.0
    %v1744 = vpack.c.bf16 %v1734, %v1732
    %v1745 = vpack.c.bf16 %v1735, %v1733
    %v1746 = vpack.c.bf16 %v1738, %v1736
    %v1747 = vpack.c.bf16 %v1739, %v1737
    %v1748 = vpack.c.bf16 %v1742, %v1740
    %v1749 = vpack.c.bf16 %v1743, %v1741
    %1750 = vst [vmem:[#allocation2 + $0x10] sm:$0xff] %v1744
    %1751 = vst [vmem:[#allocation2 + $0x18] sm:$0xff] %v1745
    %1752 = vst [vmem:[#allocation2 + $0x30] sm:$0xff] %v1746
    %1753 = vst [vmem:[#allocation2 + $0x38] sm:$0xff] %v1747
    %1754 = vst [vmem:[#allocation2 + $0x50] sm:$0xff] %v1748
    %1755 = vst [vmem:[#allocation2 + $0x58] sm:$0xff] %v1749
    %v1756 = vld [vmem:[%s5] sm:$0xf]
    %v1757 = vld [vmem:[#allocation2] sm:$0xff]
    %v1758 = vld [vmem:[#allocation2 + $0x8] sm:$0xff]
    %v1759 = vld [vmem:[#allocation2 + $0x10] sm:$0xff]
    %v1760 = vld [vmem:[#allocation2 + $0x18] sm:$0xff]
    %v1761 = vld [vmem:[#allocation2 + $0x20] sm:$0xff]
    %v1762 = vld [vmem:[#allocation2 + $0x28] sm:$0xff]
    %v1763 = vld [vmem:[#allocation2 + $0x30] sm:$0xff]
    %v1764 = vld [vmem:[#allocation2 + $0x38] sm:$0xff]
    %v1765 = vld [vmem:[#allocation2 + $0x40] sm:$0xff]
    %v1766 = vld [vmem:[#allocation2 + $0x48] sm:$0xff]
    %v1767 = vld [vmem:[#allocation2 + $0x50] sm:$0xff]
    %v1768 = vld [vmem:[#allocation2 + $0x58] sm:$0xff]
    %v1769 = vld [vmem:[%s6] sm:$0xff]
    %1771 = vset.pattern.permute.xlu0 0
    %1772 = vperm.xlu0 %1771, %v1769
    %v1773 = vpop.permute.xlu0 %1772
    %vm1775 = vcmask 392192
    %v1777 = vsel %vm1775, %v1756, 0
    %1779 = vmatprep.subr.bf16.mxu0 %v1758
    %1780 = vmatpush1.bf16.msra.mxu0 %v1757
    %1781 = vmatprep.subr.bf16.mxu0 %v1762
    %1782 = vmatpush1.bf16.msra.mxu0 %v1761
    %1783 = vmatprep.subr.bf16.mxu0 %v1766
    %1784 = vmatpush1.bf16.msra.mxu0 %v1765
    %1785 = vmatprep.subr.bf16.mxu0 0
    %1786 = vmatpush1.bf16.msra.mxu0 0
    %1787 = vmatprep.subr.bf16.mxu0 0
    %1788 = vmatpush1.bf16.msra.mxu0 0
    %1789 = vmatprep.subr.bf16.mxu0 0
    %1790 = vmatpush1.bf16.msra.mxu0 0
    %1791 = vmatprep.subr.bf16.mxu0 0
    %1792 = vmatpush1.bf16.msra.mxu0 0
    %1793 = vmatprep.subr.bf16.mxu0 0
    %1794 = vmatpush1.bf16.msra.mxu0 0
    %1795 = vmatprep.subr.bf16.mxu0 0
    %1796 = vmatpush1.bf16.msra.mxu0 0
    %1797 = vmatprep.subr.bf16.mxu0 0
    %1798 = vmatpush1.bf16.msra.mxu0 0
    %1799 = vmatprep.subr.bf16.mxu0 0
    %1800 = vmatpush1.bf16.msra.mxu0 0
    %1801 = vmatprep.subr.bf16.mxu0 0
    %1802 = vmatpush1.bf16.msra.mxu0 0
    %1803 = vmatprep.subr.bf16.mxu0 0
    %1804 = vmatpush1.bf16.msra.mxu0 0
    %1805 = vmatprep.subr.bf16.mxu0 0
    %1806 = vmatpush1.bf16.msra.mxu0 0
    %1807 = vmatprep.subr.bf16.mxu0 0
    %1808 = vmatpush1.bf16.msra.mxu0 0
    %1809 = vmatprep.subr.bf16.mxu0 0
    %1810 = vmatpush1.bf16.msra.mxu0 0
    %1811 = vmatprep.mubr.bf16.mxu0 0
    %1812 = vmatmul.mubr.bf16.gmra.mrb[0].mxu0 %v1777
    %v1813 = vpop.f32.mrb[0].mxu0
    %v1814 = vadd.f32 %v1773, %v1813
    %v1815 = vpop.f32.mrb[0].mxu0
    %v1816 = vadd.f32 %v1773, %v1815
    %v1817 = vpop.f32.mrb[0].mxu0
    %v1818 = vpop.f32.mrb[0].mxu0
    %1819 = vdwg.mxu0
    %1820 = vmatprep.subr.bf16.mxu0 %v1760
    %1821 = vmatpush1.bf16.msra.mxu0 %v1759
    %1822 = vmatprep.subr.bf16.mxu0 %v1764
    %1823 = vmatpush1.bf16.msra.mxu0 %v1763
    %1824 = vmatprep.subr.bf16.mxu0 %v1768
    %1825 = vmatpush1.bf16.msra.mxu0 %v1767
    %1826 = vmatprep.subr.bf16.mxu0 0
    %1827 = vmatpush1.bf16.msra.mxu0 0
    %1828 = vmatprep.subr.bf16.mxu0 0
    %1829 = vmatpush1.bf16.msra.mxu0 0
    %1830 = vmatprep.subr.bf16.mxu0 0
    %1831 = vmatpush1.bf16.msra.mxu0 0
    %1832 = vmatprep.subr.bf16.mxu0 0
    %1833 = vmatpush1.bf16.msra.mxu0 0
    %1834 = vmatprep.subr.bf16.mxu0 0
    %1835 = vmatpush1.bf16.msra.mxu0 0
    %1836 = vmatprep.subr.bf16.mxu0 0
    %1837 = vmatpush1.bf16.msra.mxu0 0
    %1838 = vmatprep.subr.bf16.mxu0 0
    %1839 = vmatpush1.bf16.msra.mxu0 0
    %1840 = vmatprep.subr.bf16.mxu0 0
    %1841 = vmatpush1.bf16.msra.mxu0 0
    %1842 = vmatprep.subr.bf16.mxu0 0
    %1843 = vmatpush1.bf16.msra.mxu0 0
    %1844 = vmatprep.subr.bf16.mxu0 0
    %1845 = vmatpush1.bf16.msra.mxu0 0
    %1846 = vmatprep.subr.bf16.mxu0 0
    %1847 = vmatpush1.bf16.msra.mxu0 0
    %1848 = vmatprep.subr.bf16.mxu0 0
    %1849 = vmatpush1.bf16.msra.mxu0 0
    %1850 = vmatprep.subr.bf16.mxu0 0
    %1851 = vmatpush1.bf16.msra.mxu0 0
    %1852 = vmatprep.mubr.bf16.mxu0 0
    %1853 = vmatmul.mubr.bf16.gmra.mrb[0].mxu0 %v1777
    %v1854 = vpop.f32.mrb[0].mxu0
    %v1855 = vadd.f32 %v1773, %v1854
    %v1856 = vpop.f32.mrb[0].mxu0
    %v1857 = vadd.f32 %v1773, %v1856
    %v1858 = vpop.f32.mrb[0].mxu0
    %v1859 = vpop.f32.mrb[0].mxu0
    %1860 = vdwg.mxu0
    %v1861 = vld [vmem:[%s0] sm:$0xff]
    %v1862 = vld [vmem:[%s0 + $0x8] sm:$0xff]
    %v1863 = vld [vmem:[%s0 + $0x10] sm:$0xff]
    %v1864 = vld [vmem:[%s0 + $0x18] sm:$0xff]
    %v1865 = vadd.f32 %v1814, %v1861
    %v1866 = vadd.f32 %v1816, %v1862
    %v1867 = vadd.f32 %v1855, %v1863
    %v1868 = vadd.f32 %v1857, %v1864
    %1869 = vst [vmem:[#allocation6] sm:$0xff] %v1865
    %1870 = vst [vmem:[#allocation6 + $0x8] sm:$0xff] %v1866
    %1871 = vst [vmem:[#allocation6 + $0x10] sm:$0xff] %v1867
    %1872 = vst [vmem:[#allocation6 + $0x18] sm:$0xff] %v1868
    // Predicated region
    $region34: #{tpu_custom_call.1} parent=1 // pred_check
      _
    $region35: #{tpu_custom_call.1} parent=1 // pred_check_branch
      %1874 = sbr.rel (0) target = $region37
    $region36: #{tpu_custom_call.1} parent=1 // pred_region
      %s1876 = ssub.s32 512, 512
      %1877 = vsyncadd [#allocation5], %s1876
      %s1879 = sshll.u32 [#allocation6], 4
      %s1880 = int_to_ptr.vmem [resolvable:$true] %s1879
      %1882 = dma.vmem_to_hbm [thread:$0]  %s1880, 512, %s7, [#allocation5]
    $region37: #{tpu_custom_call.1} parent=1 // pred_fallthru
      _
    // Predicated region
    $region38: #{tpu_custom_call.1} parent=1 // pred_check
      _
    $region39: #{tpu_custom_call.1} parent=1 // pred_check_branch
      %1884 = sbr.rel (0) target = $region41
    $region40: #{tpu_custom_call.1} parent=1 // pred_region
      %1885 = dma.done [#allocation5], 512
    $region41: #{tpu_custom_call.1} parent=1 // pred_fallthru
      _
    %1886 = vsyncpa [#allocation4], 1
    %1887 = vsyncpa [#allocation5], 1

</llo_original>
